<compile_context>
chip_gen: v6e
topology: v6e:2x2x1
jax: 0.10.0
libtpu: 0.0.40
codegen_flags: <defaults>
</compile_context>

<pallas_src>
import functools

import jax
import jax.numpy as jnp
from jax import lax
from jax.experimental import pallas as pl
from jax.experimental.pallas import tpu as pltpu

_B_BLK = 8    # f32 sublane count — one batch block per grid step
_LANE = 128   # lane width — hidden dim padded up to a multiple of this


def _round_up(x, m):
    return ((x + m - 1) // m) * m


def _lstm_recurrence_kernel(gates_ref, whh_ref, y_ref, hT_ref, cT_ref):
    """Full LSTM recurrence for one batch block in a single kernel invocation.

    gates_ref : (T, B_BLK, 4*Hp) precomputed x_t @ W_ih^T + (b_ih + b_hh)  (hoisted input proj)
    whh_ref   : (Hp, 4*Hp)       recurrent weight, resident in VMEM
    y_ref     : (T, B_BLK, Hp)   per-step hidden states (time-major)
    hT_ref/cT_ref : (B_BLK, Hp)  final state, written once after the loop
    Gate order follows PyTorch: i, f, g, o; gate boundaries sit at 128-lane multiples.
    """
    T = gates_ref.shape[0]
    Bb = gates_ref.shape[1]
    Hp = whh_ref.shape[0]

    def step(t, carry):
        h, c = carry
        # Only the recurrent matmul sits on the serial path now.
        g = gates_ref[t] + jnp.dot(h, whh_ref[...], preferred_element_type=jnp.float32)
        i_g = jax.nn.sigmoid(g[:, 0 * Hp:1 * Hp])
        f_g = jax.nn.sigmoid(g[:, 1 * Hp:2 * Hp])
        g_g = jnp.tanh(g[:, 2 * Hp:3 * Hp])
        o_g = jax.nn.sigmoid(g[:, 3 * Hp:4 * Hp])
        c_new = f_g * c + i_g * g_g
        h_new = o_g * jnp.tanh(c_new)
        y_ref[t] = h_new.astype(y_ref.dtype)
        return h_new, c_new

    zeros = jnp.zeros((Bb, Hp), jnp.float32)   # prev_state=None -> zero initial (h, c)
    # Short fixed trip counts: unroll for scheduler visibility; keep rolled when T is large.
    hT, cT = lax.fori_loop(0, T, step, (zeros, zeros), unroll=(T <= 16))
    hT_ref[...] = hT.astype(hT_ref.dtype)
    cT_ref[...] = cT.astype(cT_ref.dtype)


def lstm_recurrence_pallas(gates_in, w_hh_t_pad):
    """gates_in: (T, Bp, 4*Hp) time-major precomputed input gates; returns y, h_n, c_n."""
    T, Bp, G4 = gates_in.shape
    Hp = w_hh_t_pad.shape[0]
    assert G4 == 4 * Hp and Bp % _B_BLK == 0
    nb = Bp // _B_BLK
    grid_spec = pltpu.PrefetchScalarGridSpec(
        num_scalar_prefetch=0,
        grid=(nb,),   # independent batch blocks — megacore-parallel
        in_specs=[
            pl.BlockSpec((T, _B_BLK, G4), lambda b: (0, b, 0)),   # whole sequence, one bulk DMA
            pl.BlockSpec((Hp, G4), lambda b: (0, 0)),             # resident recurrent weight
        ],
        out_specs=[
            pl.BlockSpec((T, _B_BLK, Hp), lambda b: (0, b, 0)),   # y, one bulk writeback
            pl.BlockSpec((_B_BLK, Hp), lambda b: (b, 0)),          # h_n
            pl.BlockSpec((_B_BLK, Hp), lambda b: (b, 0)),          # c_n
        ],
    )
    return pl.pallas_call(
        _lstm_recurrence_kernel,
        out_shape=(
            jax.ShapeDtypeStruct((T, Bp, Hp), jnp.float32),
            jax.ShapeDtypeStruct((Bp, Hp), jnp.float32),
            jax.ShapeDtypeStruct((Bp, Hp), jnp.float32),
        ),
        grid_spec=grid_spec,
        compiler_params=pltpu.CompilerParams(
            dimension_semantics=("parallel",),   # batch blocks are independent
        ),
    )(gates_in, w_hh_t_pad)


@functools.partial(jax.jit, static_argnames=("blank_index", "add_sos"))
def _forward_impl(embedding, w_ih_t_pad, w_hh_t_pad, bias_pad, input_prefix,
                  *, blank_index, add_sos):
    B = input_prefix.shape[0]
    H = embedding.shape[1]
    Hp = w_hh_t_pad.shape[0]

    if add_sos:
        sos = jnp.full((B, 1), blank_index, dtype=input_prefix.dtype)
        input_prefix = jnp.concatenate([sos, input_prefix], axis=-1)   # (B, U+1)
    T = input_prefix.shape[1]
    Bp = _round_up(B, _B_BLK)

    # Pad the batch with blank tokens (embedding row is zero); padded rows are sliced off below.
    tok = jnp.pad(input_prefix, ((0, Bp - B), (0, 0)), constant_values=blank_index)
    tok_t = tok.T                                                     # (T, Bp) tiny int32 transpose
    x = jnp.take(embedding, tok_t, axis=0).astype(jnp.float32)        # (T, Bp, H)

    # Hoisted input projection: one big, fully-parallel matmul + bias in plain XLA.
    gates_in = (x.reshape(T * Bp, H) @ w_ih_t_pad + bias_pad).reshape(T, Bp, 4 * Hp)

    y, h_n, c_n = lstm_recurrence_pallas(gates_in, w_hh_t_pad)

    # TODO(synk): write y batch-major inside the kernel (dynamic second-minor store) to drop
    # this final wrapper transpose; it is negligible at these sizes.
    output = jnp.transpose(y[:, :B, :H], (1, 0, 2))                   # (B, T, H)
    return output, (h_n[:B, :H][None, ...], c_n[:B, :H][None, ...])


def min_prediction_network_forward(params, input_prefix, input_lengths, add_sos=True):
    """JAX/Pallas equivalent of MinPredictionNetwork.forward (eval mode)."""
    del input_lengths   # unused by the PyTorch forward; kept for signature parity
    return _forward_impl(
        params["embedding"], params["w_ih_t_pad"], params["w_hh_t_pad"], params["bias_pad"],
        input_prefix, blank_index=params["blank_index"], add_sos=add_sos)


def make_params(vocab_size, hidden_dim, key):
    """Deterministic synthetic parameters, PyTorch-style shapes/init ranges (+ padded copies)."""
    H = hidden_dim
    Hp = _round_up(H, _LANE)
    k_emb, k1, k2, k3, k4 = jax.random.split(key, 5)
    bound = 1.0 / jnp.sqrt(H)
    emb = jax.random.normal(k_emb, (vocab_size + 1, H), jnp.float32) * 0.1
    emb = emb.at[vocab_size].set(0.0)                    # padding_idx = blank_index -> zero row
    w_ih = jax.random.uniform(k1, (4 * H, H), jnp.float32, -bound, bound)   # weight_ih_l0
    w_hh = jax.random.uniform(k2, (4 * H, H), jnp.float32, -bound, bound)   # weight_hh_l0
    b_ih = jax.random.uniform(k3, (4 * H,), jnp.float32, -bound, bound)
    b_hh = jax.random.uniform(k4, (4 * H,), jnp.float32, -bound, bound)
    bias = b_ih + b_hh

    w_ih_t = w_ih.T                                      # (H, 4H)
    w_hh_t = w_hh.T                                      # (H, 4H)

    # Gate-aligned zero padding: each gate's block is placed at a 128-lane multiple, so
    # in-kernel gate slices are whole-vreg slices. Padded h/c lanes stay exactly zero
    # (zero weights + zero bias => f=0.5, g=0, i*g=0, c stays 0, h = o*tanh(0) = 0).
    w_ih_t_pad = jnp.zeros((H, 4 * Hp), jnp.float32)
    w_hh_t_pad = jnp.zeros((Hp, 4 * Hp), jnp.float32)
    bias_pad = jnp.zeros((4 * Hp,), jnp.float32)
    for k in range(4):
        w_ih_t_pad = w_ih_t_pad.at[:, k * Hp:k * Hp + H].set(w_ih_t[:, k * H:(k + 1) * H])
        w_hh_t_pad = w_hh_t_pad.at[:H, k * Hp:k * Hp + H].set(w_hh_t[:, k * H:(k + 1) * H])
        bias_pad = bias_pad.at[k * Hp:k * Hp + H].set(bias[k * H:(k + 1) * H])

    return {
        "blank_index": vocab_size,
        "hidden_dim": H,
        "hidden_pad": Hp,
        "embedding": emb,
        # kernel-path (padded) parameters
        "w_ih_t_pad": w_ih_t_pad,
        "w_hh_t_pad": w_hh_t_pad,
        "bias_pad": bias_pad[None, :],
        # unpadded parameters kept for the pure-JAX reference
        "w_ih_t": w_ih_t,
        "w_hh_t": w_hh_t,
        "bias": bias[None, :],
    }


def _reference_forward(params, input_prefix, add_sos=True):
    """Pure-JAX reference (lax.scan LSTM, unpadded weights) for correctness check."""
    blank_index = params["blank_index"]
    B = input_prefix.shape[0]
    H = params["embedding"].shape[1]
    if add_sos:
        sos = jnp.full((B, 1), blank_index, dtype=input_prefix.dtype)
        input_prefix = jnp.concatenate([sos, input_prefix], axis=-1)
    x = jnp.take(params["embedding"], input_prefix, axis=0)
    x_tbh = jnp.transpose(x, (1, 0, 2)).astype(jnp.float32)

    def step(carry, x_t):
        h, c = carry
        gates = x_t @ params["w_ih_t"] + h @ params["w_hh_t"] + params["bias"]
        i = jax.nn.sigmoid(gates[:, 0 * H:1 * H])
        f = jax.nn.sigmoid(gates[:, 1 * H:2 * H])
        g = jnp.tanh(gates[:, 2 * H:3 * H])
        o = jax.nn.sigmoid(gates[:, 3 * H:4 * H])
        c = f * c + i * g
        h = o * jnp.tanh(c)
        return (h, c), h

    init = (jnp.zeros((B, H), jnp.float32), jnp.zeros((B, H), jnp.float32))
    (h_n, c_n), ys = jax.lax.scan(step, init, x_tbh)
    return jnp.transpose(ys, (1, 0, 2)), (h_n[None], c_n[None])


if __name__ == "__main__":
    VOCAB = 10
    HIDDEN = 32
    B, U = 2, 8

    key = jax.random.PRNGKey(0)
    k_params, k_tok = jax.random.split(key)
    params = make_params(VOCAB, HIDDEN, k_params)

    input_prefix = jax.random.randint(k_tok, (B, U), 0, VOCAB, dtype=jnp.int32)
    input_lengths = jnp.full((B,), U, dtype=jnp.int32)

    out, (h_n, c_n) = min_prediction_network_forward(params, input_prefix, input_lengths)
    out = jax.block_until_ready(out)
    h_n = jax.block_until_ready(h_n)
    c_n = jax.block_until_ready(c_n)

    assert out.shape == (B, U + 1, HIDDEN), out.shape
    assert h_n.shape == (1, B, HIDDEN) and c_n.shape == (1, B, HIDDEN)

    ref_out, (ref_h, ref_c) = _reference_forward(params, input_prefix)
    assert jnp.allclose(out, ref_out, atol=1e-5, rtol=1e-5)
    assert jnp.allclose(h_n, ref_h, atol=1e-5, rtol=1e-5)
    assert jnp.allclose(c_n, ref_c, atol=1e-5, rtol=1e-5)

    print("KERNEL_OK")
</pallas_src>

<mosaic_0001>
module attributes {stable_mosaic.version = 11 : i64} {
  func.func @_lstm_recurrence_kernel(%arg0: i32, %arg1: memref<9x8x512xf32, #tpu.memory_space<vmem>>, %arg2: memref<128x512xf32, #tpu.memory_space<vmem>>, %arg3: memref<9x8x128xf32, #tpu.memory_space<vmem>>, %arg4: memref<8x128xf32, #tpu.memory_space<vmem>>, %arg5: memref<8x128xf32, #tpu.memory_space<vmem>>) attributes {dimension_semantics = [#tpu.dimension_semantics<parallel>], iteration_bounds = array<i64: 1>, scalar_prefetch = 0 : i64, scratch_operands = 0 : i64, tpu.core_type = #tpu.core_type<tc>, window_params = [{transform_indices = @transform_0, window_bounds = array<i64: 9, 8, 512>}, {pipeline_mode = #tpu.pipeline_mode<synchronous>, transform_indices = @transform_1, window_bounds = array<i64: 128, 512>}, {transform_indices = @transform_2, window_bounds = array<i64: 9, 8, 128>}, {transform_indices = @transform_3, window_bounds = array<i64: 8, 128>}, {transform_indices = @transform_4, window_bounds = array<i64: 8, 128>}]} {
    %cst = arith.constant 0.000000e+00 : f32
    %0 = vector.broadcast %cst : f32 to vector<8x128xf32>
    %c0_i32 = arith.constant 0 : i32
    %1 = arith.index_cast %c0_i32 : i32 to index
    %c0 = arith.constant 0 : index
    %c0_0 = arith.constant 0 : index
    %2 = vector.load %arg1[%1, %c0, %c0_0] : memref<9x8x512xf32, #tpu.memory_space<vmem>>, vector<1x8x512xf32>
    %3 = vector.shape_cast %2 : vector<1x8x512xf32> to vector<8x512xf32>
    %c0_1 = arith.constant 0 : index
    %c0_2 = arith.constant 0 : index
    %4 = vector.load %arg2[%c0_1, %c0_2] : memref<128x512xf32, #tpu.memory_space<vmem>>, vector<128x512xf32>
    %cst_3 = arith.constant dense<0.000000e+00> : vector<8x512xf32>
    %5 = tpu.matmul %0, %4, %cst_3 {dimension_numbers = #tpu.dot_dimension_numbers<[1], [0], [0], [1], [0, 0, 1, 1], [], []>} : vector<8x128xf32>, vector<128x512xf32>, vector<8x512xf32> -> vector<8x512xf32>
    %6 = arith.addf %3, %5 : vector<8x512xf32>
    %7 = vector.extract_strided_slice %6 {offsets = [0, 0], sizes = [8, 128], strides = [1, 1]} : vector<8x512xf32> to vector<8x128xf32>
    %8 = arith.negf %7 : vector<8x128xf32>
    %9 = math.exp %8 : vector<8x128xf32>
    %cst_4 = arith.constant 1.000000e+00 : f32
    %10 = vector.broadcast %cst_4 : f32 to vector<8x128xf32>
    %11 = arith.addf %10, %9 : vector<8x128xf32>
    %12 = arith.divf %10, %11 : vector<8x128xf32>
    %13 = vector.extract_strided_slice %6 {offsets = [0, 128], sizes = [8, 128], strides = [1, 1]} : vector<8x512xf32> to vector<8x128xf32>
    %14 = arith.negf %13 : vector<8x128xf32>
    %15 = math.exp %14 : vector<8x128xf32>
    %cst_5 = arith.constant 1.000000e+00 : f32
    %16 = vector.broadcast %cst_5 : f32 to vector<8x128xf32>
    %17 = arith.addf %16, %15 : vector<8x128xf32>
    %18 = arith.divf %16, %17 : vector<8x128xf32>
    %19 = vector.extract_strided_slice %6 {offsets = [0, 256], sizes = [8, 128], strides = [1, 1]} : vector<8x512xf32> to vector<8x128xf32>
    %20 = math.tanh %19 : vector<8x128xf32>
    %21 = vector.extract_strided_slice %6 {offsets = [0, 384], sizes = [8, 128], strides = [1, 1]} : vector<8x512xf32> to vector<8x128xf32>
    %22 = arith.negf %21 : vector<8x128xf32>
    %23 = math.exp %22 : vector<8x128xf32>
    %cst_6 = arith.constant 1.000000e+00 : f32
    %24 = vector.broadcast %cst_6 : f32 to vector<8x128xf32>
    %25 = arith.addf %24, %23 : vector<8x128xf32>
    %26 = arith.divf %24, %25 : vector<8x128xf32>
    %27 = arith.mulf %18, %0 : vector<8x128xf32>
    %28 = arith.mulf %12, %20 : vector<8x128xf32>
    %29 = arith.addf %27, %28 : vector<8x128xf32>
    %30 = math.tanh %29 : vector<8x128xf32>
    %31 = arith.mulf %26, %30 : vector<8x128xf32>
    %32 = arith.index_cast %c0_i32 : i32 to index
    %c0_7 = arith.constant 0 : index
    %c0_8 = arith.constant 0 : index
    %33 = vector.load %arg3[%32, %c0_7, %c0_8] : memref<9x8x128xf32, #tpu.memory_space<vmem>>, vector<1x8x128xf32>
    %34 = vector.shape_cast %33 : vector<1x8x128xf32> to vector<8x128xf32>
    %35 = vector.shape_cast %31 : vector<8x128xf32> to vector<1x8x128xf32>
    tpu.vector_store %arg3[%32, %c0_7, %c0_8], %35 {strides = array<i32>} : memref<9x8x128xf32, #tpu.memory_space<vmem>>, vector<1x8x128xf32>,
    %c1_i32 = arith.constant 1 : i32
    %36 = arith.index_cast %c1_i32 : i32 to index
    %c0_9 = arith.constant 0 : index
    %c0_10 = arith.constant 0 : index
    %37 = vector.load %arg1[%36, %c0_9, %c0_10] : memref<9x8x512xf32, #tpu.memory_space<vmem>>, vector<1x8x512xf32>
    %38 = vector.shape_cast %37 : vector<1x8x512xf32> to vector<8x512xf32>
    %c0_11 = arith.constant 0 : index
    %c0_12 = arith.constant 0 : index
    %39 = vector.load %arg2[%c0_11, %c0_12] : memref<128x512xf32, #tpu.memory_space<vmem>>, vector<128x512xf32>
    %cst_13 = arith.constant dense<0.000000e+00> : vector<8x512xf32>
    %40 = tpu.matmul %31, %39, %cst_13 {dimension_numbers = #tpu.dot_dimension_numbers<[1], [0], [0], [1], [0, 0, 1, 1], [], []>} : vector<8x128xf32>, vector<128x512xf32>, vector<8x512xf32> -> vector<8x512xf32>
    %41 = arith.addf %38, %40 : vector<8x512xf32>
    %42 = vector.extract_strided_slice %41 {offsets = [0, 0], sizes = [8, 128], strides = [1, 1]} : vector<8x512xf32> to vector<8x128xf32>
    %43 = arith.negf %42 : vector<8x128xf32>
    %44 = math.exp %43 : vector<8x128xf32>
    %cst_14 = arith.constant 1.000000e+00 : f32
    %45 = vector.broadcast %cst_14 : f32 to vector<8x128xf32>
    %46 = arith.addf %45, %44 : vector<8x128xf32>
    %47 = arith.divf %45, %46 : vector<8x128xf32>
    %48 = vector.extract_strided_slice %41 {offsets = [0, 128], sizes = [8, 128], strides = [1, 1]} : vector<8x512xf32> to vector<8x128xf32>
    %49 = arith.negf %48 : vector<8x128xf32>
    %50 = math.exp %49 : vector<8x128xf32>
    %cst_15 = arith.constant 1.000000e+00 : f32
    %51 = vector.broadcast %cst_15 : f32 to vector<8x128xf32>
    %52 = arith.addf %51, %50 : vector<8x128xf32>
    %53 = arith.divf %51, %52 : vector<8x128xf32>
    %54 = vector.extract_strided_slice %41 {offsets = [0, 256], sizes = [8, 128], strides = [1, 1]} : vector<8x512xf32> to vector<8x128xf32>
    %55 = math.tanh %54 : vector<8x128xf32>
    %56 = vector.extract_strided_slice %41 {offsets = [0, 384], sizes = [8, 128], strides = [1, 1]} : vector<8x512xf32> to vector<8x128xf32>
    %57 = arith.negf %56 : vector<8x128xf32>
    %58 = math.exp %57 : vector<8x128xf32>
    %cst_16 = arith.constant 1.000000e+00 : f32
    %59 = vector.broadcast %cst_16 : f32 to vector<8x128xf32>
    %60 = arith.addf %59, %58 : vector<8x128xf32>
    %61 = arith.divf %59, %60 : vector<8x128xf32>
    %62 = arith.mulf %53, %29 : vector<8x128xf32>
    %63 = arith.mulf %47, %55 : vector<8x128xf32>
    %64 = arith.addf %62, %63 : vector<8x128xf32>
    %65 = math.tanh %64 : vector<8x128xf32>
    %66 = arith.mulf %61, %65 : vector<8x128xf32>
    %67 = arith.index_cast %c1_i32 : i32 to index
    %c0_17 = arith.constant 0 : index
    %c0_18 = arith.constant 0 : index
    %68 = vector.load %arg3[%67, %c0_17, %c0_18] : memref<9x8x128xf32, #tpu.memory_space<vmem>>, vector<1x8x128xf32>
    %69 = vector.shape_cast %68 : vector<1x8x128xf32> to vector<8x128xf32>
    %70 = vector.shape_cast %66 : vector<8x128xf32> to vector<1x8x128xf32>
    tpu.vector_store %arg3[%67, %c0_17, %c0_18], %70 {strides = array<i32>} : memref<9x8x128xf32, #tpu.memory_space<vmem>>, vector<1x8x128xf32>,
    %c2_i32 = arith.constant 2 : i32
    %71 = arith.index_cast %c2_i32 : i32 to index
    %c0_19 = arith.constant 0 : index
    %c0_20 = arith.constant 0 : index
    %72 = vector.load %arg1[%71, %c0_19, %c0_20] : memref<9x8x512xf32, #tpu.memory_space<vmem>>, vector<1x8x512xf32>
    %73 = vector.shape_cast %72 : vector<1x8x512xf32> to vector<8x512xf32>
    %c0_21 = arith.constant 0 : index
    %c0_22 = arith.constant 0 : index
    %74 = vector.load %arg2[%c0_21, %c0_22] : memref<128x512xf32, #tpu.memory_space<vmem>>, vector<128x512xf32>
    %cst_23 = arith.constant dense<0.000000e+00> : vector<8x512xf32>
    %75 = tpu.matmul %66, %74, %cst_23 {dimension_numbers = #tpu.dot_dimension_numbers<[1], [0], [0], [1], [0, 0, 1, 1], [], []>} : vector<8x128xf32>, vector<128x512xf32>, vector<8x512xf32> -> vector<8x512xf32>
    %76 = arith.addf %73, %75 : vector<8x512xf32>
    %77 = vector.extract_strided_slice %76 {offsets = [0, 0], sizes = [8, 128], strides = [1, 1]} : vector<8x512xf32> to vector<8x128xf32>
    %78 = arith.negf %77 : vector<8x128xf32>
    %79 = math.exp %78 : vector<8x128xf32>
    %cst_24 = arith.constant 1.000000e+00 : f32
    %80 = vector.broadcast %cst_24 : f32 to vector<8x128xf32>
    %81 = arith.addf %80, %79 : vector<8x128xf32>
    %82 = arith.divf %80, %81 : vector<8x128xf32>
    %83 = vector.extract_strided_slice %76 {offsets = [0, 128], sizes = [8, 128], strides = [1, 1]} : vector<8x512xf32> to vector<8x128xf32>
    %84 = arith.negf %83 : vector<8x128xf32>
    %85 = math.exp %84 : vector<8x128xf32>
    %cst_25 = arith.constant 1.000000e+00 : f32
    %86 = vector.broadcast %cst_25 : f32 to vector<8x128xf32>
    %87 = arith.addf %86, %85 : vector<8x128xf32>
    %88 = arith.divf %86, %87 : vector<8x128xf32>
    %89 = vector.extract_strided_slice %76 {offsets = [0, 256], sizes = [8, 128], strides = [1, 1]} : vector<8x512xf32> to vector<8x128xf32>
    %90 = math.tanh %89 : vector<8x128xf32>
    %91 = vector.extract_strided_slice %76 {offsets = [0, 384], sizes = [8, 128], strides = [1, 1]} : vector<8x512xf32> to vector<8x128xf32>
    %92 = arith.negf %91 : vector<8x128xf32>
    %93 = math.exp %92 : vector<8x128xf32>
    %cst_26 = arith.constant 1.000000e+00 : f32
    %94 = vector.broadcast %cst_26 : f32 to vector<8x128xf32>
    %95 = arith.addf %94, %93 : vector<8x128xf32>
    %96 = arith.divf %94, %95 : vector<8x128xf32>
    %97 = arith.mulf %88, %64 : vector<8x128xf32>
    %98 = arith.mulf %82, %90 : vector<8x128xf32>
    %99 = arith.addf %97, %98 : vector<8x128xf32>
    %100 = math.tanh %99 : vector<8x128xf32>
    %101 = arith.mulf %96, %100 : vector<8x128xf32>
    %102 = arith.index_cast %c2_i32 : i32 to index
    %c0_27 = arith.constant 0 : index
    %c0_28 = arith.constant 0 : index
    %103 = vector.load %arg3[%102, %c0_27, %c0_28] : memref<9x8x128xf32, #tpu.memory_space<vmem>>, vector<1x8x128xf32>
    %104 = vector.shape_cast %103 : vector<1x8x128xf32> to vector<8x128xf32>
    %105 = vector.shape_cast %101 : vector<8x128xf32> to vector<1x8x128xf32>
    tpu.vector_store %arg3[%102, %c0_27, %c0_28], %105 {strides = array<i32>} : memref<9x8x128xf32, #tpu.memory_space<vmem>>, vector<1x8x128xf32>,
    %c3_i32 = arith.constant 3 : i32
    %106 = arith.index_cast %c3_i32 : i32 to index
    %c0_29 = arith.constant 0 : index
    %c0_30 = arith.constant 0 : index
    %107 = vector.load %arg1[%106, %c0_29, %c0_30] : memref<9x8x512xf32, #tpu.memory_space<vmem>>, vector<1x8x512xf32>
    %108 = vector.shape_cast %107 : vector<1x8x512xf32> to vector<8x512xf32>
    %c0_31 = arith.constant 0 : index
    %c0_32 = arith.constant 0 : index
    %109 = vector.load %arg2[%c0_31, %c0_32] : memref<128x512xf32, #tpu.memory_space<vmem>>, vector<128x512xf32>
    %cst_33 = arith.constant dense<0.000000e+00> : vector<8x512xf32>
    %110 = tpu.matmul %101, %109, %cst_33 {dimension_numbers = #tpu.dot_dimension_numbers<[1], [0], [0], [1], [0, 0, 1, 1], [], []>} : vector<8x128xf32>, vector<128x512xf32>, vector<8x512xf32> -> vector<8x512xf32>
    %111 = arith.addf %108, %110 : vector<8x512xf32>
    %112 = vector.extract_strided_slice %111 {offsets = [0, 0], sizes = [8, 128], strides = [1, 1]} : vector<8x512xf32> to vector<8x128xf32>
    %113 = arith.negf %112 : vector<8x128xf32>
    %114 = math.exp %113 : vector<8x128xf32>
    %cst_34 = arith.constant 1.000000e+00 : f32
    %115 = vector.broadcast %cst_34 : f32 to vector<8x128xf32>
    %116 = arith.addf %115, %114 : vector<8x128xf32>
    %117 = arith.divf %115, %116 : vector<8x128xf32>
    %118 = vector.extract_strided_slice %111 {offsets = [0, 128], sizes = [8, 128], strides = [1, 1]} : vector<8x512xf32> to vector<8x128xf32>
    %119 = arith.negf %118 : vector<8x128xf32>
    %120 = math.exp %119 : vector<8x128xf32>
    %cst_35 = arith.constant 1.000000e+00 : f32
    %121 = vector.broadcast %cst_35 : f32 to vector<8x128xf32>
    %122 = arith.addf %121, %120 : vector<8x128xf32>
    %123 = arith.divf %121, %122 : vector<8x128xf32>
    %124 = vector.extract_strided_slice %111 {offsets = [0, 256], sizes = [8, 128], strides = [1, 1]} : vector<8x512xf32> to vector<8x128xf32>
    %125 = math.tanh %124 : vector<8x128xf32>
    %126 = vector.extract_strided_slice %111 {offsets = [0, 384], sizes = [8, 128], strides = [1, 1]} : vector<8x512xf32> to vector<8x128xf32>
    %127 = arith.negf %126 : vector<8x128xf32>
    %128 = math.exp %127 : vector<8x128xf32>
    %cst_36 = arith.constant 1.000000e+00 : f32
    %129 = vector.broadcast %cst_36 : f32 to vector<8x128xf32>
    %130 = arith.addf %129, %128 : vector<8x128xf32>
    %131 = arith.divf %129, %130 : vector<8x128xf32>
    %132 = arith.mulf %123, %99 : vector<8x128xf32>
    %133 = arith.mulf %117, %125 : vector<8x128xf32>
    %134 = arith.addf %132, %133 : vector<8x128xf32>
    %135 = math.tanh %134 : vector<8x128xf32>
    %136 = arith.mulf %131, %135 : vector<8x128xf32>
    %137 = arith.index_cast %c3_i32 : i32 to index
    %c0_37 = arith.constant 0 : index
    %c0_38 = arith.constant 0 : index
    %138 = vector.load %arg3[%137, %c0_37, %c0_38] : memref<9x8x128xf32, #tpu.memory_space<vmem>>, vector<1x8x128xf32>
    %139 = vector.shape_cast %138 : vector<1x8x128xf32> to vector<8x128xf32>
    %140 = vector.shape_cast %136 : vector<8x128xf32> to vector<1x8x128xf32>
    tpu.vector_store %arg3[%137, %c0_37, %c0_38], %140 {strides = array<i32>} : memref<9x8x128xf32, #tpu.memory_space<vmem>>, vector<1x8x128xf32>,
    %c4_i32 = arith.constant 4 : i32
    %141 = arith.index_cast %c4_i32 : i32 to index
    %c0_39 = arith.constant 0 : index
    %c0_40 = arith.constant 0 : index
    %142 = vector.load %arg1[%141, %c0_39, %c0_40] : memref<9x8x512xf32, #tpu.memory_space<vmem>>, vector<1x8x512xf32>
    %143 = vector.shape_cast %142 : vector<1x8x512xf32> to vector<8x512xf32>
    %c0_41 = arith.constant 0 : index
    %c0_42 = arith.constant 0 : index
    %144 = vector.load %arg2[%c0_41, %c0_42] : memref<128x512xf32, #tpu.memory_space<vmem>>, vector<128x512xf32>
    %cst_43 = arith.constant dense<0.000000e+00> : vector<8x512xf32>
    %145 = tpu.matmul %136, %144, %cst_43 {dimension_numbers = #tpu.dot_dimension_numbers<[1], [0], [0], [1], [0, 0, 1, 1], [], []>} : vector<8x128xf32>, vector<128x512xf32>, vector<8x512xf32> -> vector<8x512xf32>
    %146 = arith.addf %143, %145 : vector<8x512xf32>
    %147 = vector.extract_strided_slice %146 {offsets = [0, 0], sizes = [8, 128], strides = [1, 1]} : vector<8x512xf32> to vector<8x128xf32>
    %148 = arith.negf %147 : vector<8x128xf32>
    %149 = math.exp %148 : vector<8x128xf32>
    %cst_44 = arith.constant 1.000000e+00 : f32
    %150 = vector.broadcast %cst_44 : f32 to vector<8x128xf32>
    %151 = arith.addf %150, %149 : vector<8x128xf32>
    %152 = arith.divf %150, %151 : vector<8x128xf32>
    %153 = vector.extract_strided_slice %146 {offsets = [0, 128], sizes = [8, 128], strides = [1, 1]} : vector<8x512xf32> to vector<8x128xf32>
    %154 = arith.negf %153 : vector<8x128xf32>
    %155 = math.exp %154 : vector<8x128xf32>
    %cst_45 = arith.constant 1.000000e+00 : f32
    %156 = vector.broadcast %cst_45 : f32 to vector<8x128xf32>
    %157 = arith.addf %156, %155 : vector<8x128xf32>
    %158 = arith.divf %156, %157 : vector<8x128xf32>
    %159 = vector.extract_strided_slice %146 {offsets = [0, 256], sizes = [8, 128], strides = [1, 1]} : vector<8x512xf32> to vector<8x128xf32>
    %160 = math.tanh %159 : vector<8x128xf32>
    %161 = vector.extract_strided_slice %146 {offsets = [0, 384], sizes = [8, 128], strides = [1, 1]} : vector<8x512xf32> to vector<8x128xf32>
    %162 = arith.negf %161 : vector<8x128xf32>
    %163 = math.exp %162 : vector<8x128xf32>
    %cst_46 = arith.constant 1.000000e+00 : f32
    %164 = vector.broadcast %cst_46 : f32 to vector<8x128xf32>
    %165 = arith.addf %164, %163 : vector<8x128xf32>
    %166 = arith.divf %164, %165 : vector<8x128xf32>
    %167 = arith.mulf %158, %134 : vector<8x128xf32>
    %168 = arith.mulf %152, %160 : vector<8x128xf32>
    %169 = arith.addf %167, %168 : vector<8x128xf32>
    %170 = math.tanh %169 : vector<8x128xf32>
    %171 = arith.mulf %166, %170 : vector<8x128xf32>
    %172 = arith.index_cast %c4_i32 : i32 to index
    %c0_47 = arith.constant 0 : index
    %c0_48 = arith.constant 0 : index
    %173 = vector.load %arg3[%172, %c0_47, %c0_48] : memref<9x8x128xf32, #tpu.memory_space<vmem>>, vector<1x8x128xf32>
    %174 = vector.shape_cast %173 : vector<1x8x128xf32> to vector<8x128xf32>
    %175 = vector.shape_cast %171 : vector<8x128xf32> to vector<1x8x128xf32>
    tpu.vector_store %arg3[%172, %c0_47, %c0_48], %175 {strides = array<i32>} : memref<9x8x128xf32, #tpu.memory_space<vmem>>, vector<1x8x128xf32>,
    %c5_i32 = arith.constant 5 : i32
    %176 = arith.index_cast %c5_i32 : i32 to index
    %c0_49 = arith.constant 0 : index
    %c0_50 = arith.constant 0 : index
    %177 = vector.load %arg1[%176, %c0_49, %c0_50] : memref<9x8x512xf32, #tpu.memory_space<vmem>>, vector<1x8x512xf32>
    %178 = vector.shape_cast %177 : vector<1x8x512xf32> to vector<8x512xf32>
    %c0_51 = arith.constant 0 : index
    %c0_52 = arith.constant 0 : index
    %179 = vector.load %arg2[%c0_51, %c0_52] : memref<128x512xf32, #tpu.memory_space<vmem>>, vector<128x512xf32>
    %cst_53 = arith.constant dense<0.000000e+00> : vector<8x512xf32>
    %180 = tpu.matmul %171, %179, %cst_53 {dimension_numbers = #tpu.dot_dimension_numbers<[1], [0], [0], [1], [0, 0, 1, 1], [], []>} : vector<8x128xf32>, vector<128x512xf32>, vector<8x512xf32> -> vector<8x512xf32>
    %181 = arith.addf %178, %180 : vector<8x512xf32>
    %182 = vector.extract_strided_slice %181 {offsets = [0, 0], sizes = [8, 128], strides = [1, 1]} : vector<8x512xf32> to vector<8x128xf32>
    %183 = arith.negf %182 : vector<8x128xf32>
    %184 = math.exp %183 : vector<8x128xf32>
    %cst_54 = arith.constant 1.000000e+00 : f32
    %185 = vector.broadcast %cst_54 : f32 to vector<8x128xf32>
    %186 = arith.addf %185, %184 : vector<8x128xf32>
    %187 = arith.divf %185, %186 : vector<8x128xf32>
    %188 = vector.extract_strided_slice %181 {offsets = [0, 128], sizes = [8, 128], strides = [1, 1]} : vector<8x512xf32> to vector<8x128xf32>
    %189 = arith.negf %188 : vector<8x128xf32>
    %190 = math.exp %189 : vector<8x128xf32>
    %cst_55 = arith.constant 1.000000e+00 : f32
    %191 = vector.broadcast %cst_55 : f32 to vector<8x128xf32>
    %192 = arith.addf %191, %190 : vector<8x128xf32>
    %193 = arith.divf %191, %192 : vector<8x128xf32>
    %194 = vector.extract_strided_slice %181 {offsets = [0, 256], sizes = [8, 128], strides = [1, 1]} : vector<8x512xf32> to vector<8x128xf32>
    %195 = math.tanh %194 : vector<8x128xf32>
    %196 = vector.extract_strided_slice %181 {offsets = [0, 384], sizes = [8, 128], strides = [1, 1]} : vector<8x512xf32> to vector<8x128xf32>
    %197 = arith.negf %196 : vector<8x128xf32>
    %198 = math.exp %197 : vector<8x128xf32>
    %cst_56 = arith.constant 1.000000e+00 : f32
    %199 = vector.broadcast %cst_56 : f32 to vector<8x128xf32>
    %200 = arith.addf %199, %198 : vector<8x128xf32>
    %201 = arith.divf %199, %200 : vector<8x128xf32>
    %202 = arith.mulf %193, %169 : vector<8x128xf32>
    %203 = arith.mulf %187, %195 : vector<8x128xf32>
    %204 = arith.addf %202, %203 : vector<8x128xf32>
    %205 = math.tanh %204 : vector<8x128xf32>
    %206 = arith.mulf %201, %205 : vector<8x128xf32>
    %207 = arith.index_cast %c5_i32 : i32 to index
    %c0_57 = arith.constant 0 : index
    %c0_58 = arith.constant 0 : index
    %208 = vector.load %arg3[%207, %c0_57, %c0_58] : memref<9x8x128xf32, #tpu.memory_space<vmem>>, vector<1x8x128xf32>
    %209 = vector.shape_cast %208 : vector<1x8x128xf32> to vector<8x128xf32>
    %210 = vector.shape_cast %206 : vector<8x128xf32> to vector<1x8x128xf32>
    tpu.vector_store %arg3[%207, %c0_57, %c0_58], %210 {strides = array<i32>} : memref<9x8x128xf32, #tpu.memory_space<vmem>>, vector<1x8x128xf32>,
    %c6_i32 = arith.constant 6 : i32
    %211 = arith.index_cast %c6_i32 : i32 to index
    %c0_59 = arith.constant 0 : index
    %c0_60 = arith.constant 0 : index
    %212 = vector.load %arg1[%211, %c0_59, %c0_60] : memref<9x8x512xf32, #tpu.memory_space<vmem>>, vector<1x8x512xf32>
    %213 = vector.shape_cast %212 : vector<1x8x512xf32> to vector<8x512xf32>
    %c0_61 = arith.constant 0 : index
    %c0_62 = arith.constant 0 : index
    %214 = vector.load %arg2[%c0_61, %c0_62] : memref<128x512xf32, #tpu.memory_space<vmem>>, vector<128x512xf32>
    %cst_63 = arith.constant dense<0.000000e+00> : vector<8x512xf32>
    %215 = tpu.matmul %206, %214, %cst_63 {dimension_numbers = #tpu.dot_dimension_numbers<[1], [0], [0], [1], [0, 0, 1, 1], [], []>} : vector<8x128xf32>, vector<128x512xf32>, vector<8x512xf32> -> vector<8x512xf32>
    %216 = arith.addf %213, %215 : vector<8x512xf32>
    %217 = vector.extract_strided_slice %216 {offsets = [0, 0], sizes = [8, 128], strides = [1, 1]} : vector<8x512xf32> to vector<8x128xf32>
    %218 = arith.negf %217 : vector<8x128xf32>
    %219 = math.exp %218 : vector<8x128xf32>
    %cst_64 = arith.constant 1.000000e+00 : f32
    %220 = vector.broadcast %cst_64 : f32 to vector<8x128xf32>
    %221 = arith.addf %220, %219 : vector<8x128xf32>
    %222 = arith.divf %220, %221 : vector<8x128xf32>
    %223 = vector.extract_strided_slice %216 {offsets = [0, 128], sizes = [8, 128], strides = [1, 1]} : vector<8x512xf32> to vector<8x128xf32>
    %224 = arith.negf %223 : vector<8x128xf32>
    %225 = math.exp %224 : vector<8x128xf32>
    %cst_65 = arith.constant 1.000000e+00 : f32
    %226 = vector.broadcast %cst_65 : f32 to vector<8x128xf32>
    %227 = arith.addf %226, %225 : vector<8x128xf32>
    %228 = arith.divf %226, %227 : vector<8x128xf32>
    %229 = vector.extract_strided_slice %216 {offsets = [0, 256], sizes = [8, 128], strides = [1, 1]} : vector<8x512xf32> to vector<8x128xf32>
    %230 = math.tanh %229 : vector<8x128xf32>
    %231 = vector.extract_strided_slice %216 {offsets = [0, 384], sizes = [8, 128], strides = [1, 1]} : vector<8x512xf32> to vector<8x128xf32>
    %232 = arith.negf %231 : vector<8x128xf32>
    %233 = math.exp %232 : vector<8x128xf32>
    %cst_66 = arith.constant 1.000000e+00 : f32
    %234 = vector.broadcast %cst_66 : f32 to vector<8x128xf32>
    %235 = arith.addf %234, %233 : vector<8x128xf32>
    %236 = arith.divf %234, %235 : vector<8x128xf32>
    %237 = arith.mulf %228, %204 : vector<8x128xf32>
    %238 = arith.mulf %222, %230 : vector<8x128xf32>
    %239 = arith.addf %237, %238 : vector<8x128xf32>
    %240 = math.tanh %239 : vector<8x128xf32>
    %241 = arith.mulf %236, %240 : vector<8x128xf32>
    %242 = arith.index_cast %c6_i32 : i32 to index
    %c0_67 = arith.constant 0 : index
    %c0_68 = arith.constant 0 : index
    %243 = vector.load %arg3[%242, %c0_67, %c0_68] : memref<9x8x128xf32, #tpu.memory_space<vmem>>, vector<1x8x128xf32>
    %244 = vector.shape_cast %243 : vector<1x8x128xf32> to vector<8x128xf32>
    %245 = vector.shape_cast %241 : vector<8x128xf32> to vector<1x8x128xf32>
    tpu.vector_store %arg3[%242, %c0_67, %c0_68], %245 {strides = array<i32>} : memref<9x8x128xf32, #tpu.memory_space<vmem>>, vector<1x8x128xf32>,
    %c7_i32 = arith.constant 7 : i32
    %246 = arith.index_cast %c7_i32 : i32 to index
    %c0_69 = arith.constant 0 : index
    %c0_70 = arith.constant 0 : index
    %247 = vector.load %arg1[%246, %c0_69, %c0_70] : memref<9x8x512xf32, #tpu.memory_space<vmem>>, vector<1x8x512xf32>
    %248 = vector.shape_cast %247 : vector<1x8x512xf32> to vector<8x512xf32>
    %c0_71 = arith.constant 0 : index
    %c0_72 = arith.constant 0 : index
    %249 = vector.load %arg2[%c0_71, %c0_72] : memref<128x512xf32, #tpu.memory_space<vmem>>, vector<128x512xf32>
    %cst_73 = arith.constant dense<0.000000e+00> : vector<8x512xf32>
    %250 = tpu.matmul %241, %249, %cst_73 {dimension_numbers = #tpu.dot_dimension_numbers<[1], [0], [0], [1], [0, 0, 1, 1], [], []>} : vector<8x128xf32>, vector<128x512xf32>, vector<8x512xf32> -> vector<8x512xf32>
    %251 = arith.addf %248, %250 : vector<8x512xf32>
    %252 = vector.extract_strided_slice %251 {offsets = [0, 0], sizes = [8, 128], strides = [1, 1]} : vector<8x512xf32> to vector<8x128xf32>
    %253 = arith.negf %252 : vector<8x128xf32>
    %254 = math.exp %253 : vector<8x128xf32>
    %cst_74 = arith.constant 1.000000e+00 : f32
    %255 = vector.broadcast %cst_74 : f32 to vector<8x128xf32>
    %256 = arith.addf %255, %254 : vector<8x128xf32>
    %257 = arith.divf %255, %256 : vector<8x128xf32>
    %258 = vector.extract_strided_slice %251 {offsets = [0, 128], sizes = [8, 128], strides = [1, 1]} : vector<8x512xf32> to vector<8x128xf32>
    %259 = arith.negf %258 : vector<8x128xf32>
    %260 = math.exp %259 : vector<8x128xf32>
    %cst_75 = arith.constant 1.000000e+00 : f32
    %261 = vector.broadcast %cst_75 : f32 to vector<8x128xf32>
    %262 = arith.addf %261, %260 : vector<8x128xf32>
    %263 = arith.divf %261, %262 : vector<8x128xf32>
    %264 = vector.extract_strided_slice %251 {offsets = [0, 256], sizes = [8, 128], strides = [1, 1]} : vector<8x512xf32> to vector<8x128xf32>
    %265 = math.tanh %264 : vector<8x128xf32>
    %266 = vector.extract_strided_slice %251 {offsets = [0, 384], sizes = [8, 128], strides = [1, 1]} : vector<8x512xf32> to vector<8x128xf32>
    %267 = arith.negf %266 : vector<8x128xf32>
    %268 = math.exp %267 : vector<8x128xf32>
    %cst_76 = arith.constant 1.000000e+00 : f32
    %269 = vector.broadcast %cst_76 : f32 to vector<8x128xf32>
    %270 = arith.addf %269, %268 : vector<8x128xf32>
    %271 = arith.divf %269, %270 : vector<8x128xf32>
    %272 = arith.mulf %263, %239 : vector<8x128xf32>
    %273 = arith.mulf %257, %265 : vector<8x128xf32>
    %274 = arith.addf %272, %273 : vector<8x128xf32>
    %275 = math.tanh %274 : vector<8x128xf32>
    %276 = arith.mulf %271, %275 : vector<8x128xf32>
    %277 = arith.index_cast %c7_i32 : i32 to index
    %c0_77 = arith.constant 0 : index
    %c0_78 = arith.constant 0 : index
    %278 = vector.load %arg3[%277, %c0_77, %c0_78] : memref<9x8x128xf32, #tpu.memory_space<vmem>>, vector<1x8x128xf32>
    %279 = vector.shape_cast %278 : vector<1x8x128xf32> to vector<8x128xf32>
    %280 = vector.shape_cast %276 : vector<8x128xf32> to vector<1x8x128xf32>
    tpu.vector_store %arg3[%277, %c0_77, %c0_78], %280 {strides = array<i32>} : memref<9x8x128xf32, #tpu.memory_space<vmem>>, vector<1x8x128xf32>,
    %c8_i32 = arith.constant 8 : i32
    %281 = arith.index_cast %c8_i32 : i32 to index
    %c0_79 = arith.constant 0 : index
    %c0_80 = arith.constant 0 : index
    %282 = vector.load %arg1[%281, %c0_79, %c0_80] : memref<9x8x512xf32, #tpu.memory_space<vmem>>, vector<1x8x512xf32>
    %283 = vector.shape_cast %282 : vector<1x8x512xf32> to vector<8x512xf32>
    %c0_81 = arith.constant 0 : index
    %c0_82 = arith.constant 0 : index
    %284 = vector.load %arg2[%c0_81, %c0_82] : memref<128x512xf32, #tpu.memory_space<vmem>>, vector<128x512xf32>
    %cst_83 = arith.constant dense<0.000000e+00> : vector<8x512xf32>
    %285 = tpu.matmul %276, %284, %cst_83 {dimension_numbers = #tpu.dot_dimension_numbers<[1], [0], [0], [1], [0, 0, 1, 1], [], []>} : vector<8x128xf32>, vector<128x512xf32>, vector<8x512xf32> -> vector<8x512xf32>
    %286 = arith.addf %283, %285 : vector<8x512xf32>
    %287 = vector.extract_strided_slice %286 {offsets = [0, 0], sizes = [8, 128], strides = [1, 1]} : vector<8x512xf32> to vector<8x128xf32>
    %288 = arith.negf %287 : vector<8x128xf32>
    %289 = math.exp %288 : vector<8x128xf32>
    %cst_84 = arith.constant 1.000000e+00 : f32
    %290 = vector.broadcast %cst_84 : f32 to vector<8x128xf32>
    %291 = arith.addf %290, %289 : vector<8x128xf32>
    %292 = arith.divf %290, %291 : vector<8x128xf32>
    %293 = vector.extract_strided_slice %286 {offsets = [0, 128], sizes = [8, 128], strides = [1, 1]} : vector<8x512xf32> to vector<8x128xf32>
    %294 = arith.negf %293 : vector<8x128xf32>
    %295 = math.exp %294 : vector<8x128xf32>
    %cst_85 = arith.constant 1.000000e+00 : f32
    %296 = vector.broadcast %cst_85 : f32 to vector<8x128xf32>
    %297 = arith.addf %296, %295 : vector<8x128xf32>
    %298 = arith.divf %296, %297 : vector<8x128xf32>
    %299 = vector.extract_strided_slice %286 {offsets = [0, 256], sizes = [8, 128], strides = [1, 1]} : vector<8x512xf32> to vector<8x128xf32>
    %300 = math.tanh %299 : vector<8x128xf32>
    %301 = vector.extract_strided_slice %286 {offsets = [0, 384], sizes = [8, 128], strides = [1, 1]} : vector<8x512xf32> to vector<8x128xf32>
    %302 = arith.negf %301 : vector<8x128xf32>
    %303 = math.exp %302 : vector<8x128xf32>
    %cst_86 = arith.constant 1.000000e+00 : f32
    %304 = vector.broadcast %cst_86 : f32 to vector<8x128xf32>
    %305 = arith.addf %304, %303 : vector<8x128xf32>
    %306 = arith.divf %304, %305 : vector<8x128xf32>
    %307 = arith.mulf %298, %274 : vector<8x128xf32>
    %308 = arith.mulf %292, %300 : vector<8x128xf32>
    %309 = arith.addf %307, %308 : vector<8x128xf32>
    %310 = math.tanh %309 : vector<8x128xf32>
    %311 = arith.mulf %306, %310 : vector<8x128xf32>
    %312 = arith.index_cast %c8_i32 : i32 to index
    %c0_87 = arith.constant 0 : index
    %c0_88 = arith.constant 0 : index
    %313 = vector.load %arg3[%312, %c0_87, %c0_88] : memref<9x8x128xf32, #tpu.memory_space<vmem>>, vector<1x8x128xf32>
    %314 = vector.shape_cast %313 : vector<1x8x128xf32> to vector<8x128xf32>
    %315 = vector.shape_cast %311 : vector<8x128xf32> to vector<1x8x128xf32>
    tpu.vector_store %arg3[%312, %c0_87, %c0_88], %315 {strides = array<i32>} : memref<9x8x128xf32, #tpu.memory_space<vmem>>, vector<1x8x128xf32>,
    %c9_i32 = arith.constant 9 : i32
    %c0_89 = arith.constant 0 : index
    %c0_90 = arith.constant 0 : index
    %316 = vector.load %arg4[%c0_89, %c0_90] : memref<8x128xf32, #tpu.memory_space<vmem>>, vector<8x128xf32>
    tpu.vector_store %arg4[%c0_89, %c0_90], %311 {strides = array<i32>} : memref<8x128xf32, #tpu.memory_space<vmem>>, vector<8x128xf32>,
    %c0_91 = arith.constant 0 : index
    %c0_92 = arith.constant 0 : index
    %317 = vector.load %arg5[%c0_91, %c0_92] : memref<8x128xf32, #tpu.memory_space<vmem>>, vector<8x128xf32>
    tpu.vector_store %arg5[%c0_91, %c0_92], %309 {strides = array<i32>} : memref<8x128xf32, #tpu.memory_space<vmem>>, vector<8x128xf32>,
    return
  }
  func.func @transform_0(%arg0: i32) -> (i32, i32, i32) {
    %c0_i32 = arith.constant 0 : i32
    %c0_i32_0 = arith.constant 0 : i32
    %c0_i32_1 = arith.constant 0 : i32
    return %c0_i32, %arg0, %c0_i32_0 : i32, i32, i32
  }
  func.func @transform_1(%arg0: i32) -> (i32, i32) {
    %c0_i32 = arith.constant 0 : i32
    %c0_i32_0 = arith.constant 0 : i32
    %c0_i32_1 = arith.constant 0 : i32
    return %c0_i32, %c0_i32_0 : i32, i32
  }
  func.func @transform_2(%arg0: i32) -> (i32, i32, i32) {
    %c0_i32 = arith.constant 0 : i32
    %c0_i32_0 = arith.constant 0 : i32
    %c0_i32_1 = arith.constant 0 : i32
    return %c0_i32, %arg0, %c0_i32_0 : i32, i32, i32
  }
  func.func @transform_3(%arg0: i32) -> (i32, i32) {
    %c0_i32 = arith.constant 0 : i32
    %c0_i32_0 = arith.constant 0 : i32
    return %arg0, %c0_i32 : i32, i32
  }
  func.func @transform_4(%arg0: i32) -> (i32, i32) {
    %c0_i32 = arith.constant 0 : i32
    %c0_i32_0 = arith.constant 0 : i32
    return %arg0, %c0_i32 : i32, i32
  }
}

</mosaic_0001>

<llo_original>
// kernel: _forward_impl.1
$region0: #{_forward_impl.1}
  #allocation0 [shape = 'u32[]', space=smem, size = 0x4, offset = 0x4, fixed_abs, tag = 'smem constant byte address 0x4 - core index']
  #allocation1 [shape = 'u32[144,128]{1,0:T(1,128)}', space=vmem, size = 0x12000, scoped, tag = 'internal scratch']
  %s0 = inlined_call_operand.vmem [shape: f32[9,8,512], index: 0, kind: input, shape index: {}]
  %s1 = inlined_call_operand.vmem [shape: f32[128,512], index: 1, kind: input, shape index: {}]
  %s2 = inlined_call_operand.vmem [shape: f32[9,8,128], index: 2, kind: output, shape index: {0}]
  %s3 = inlined_call_operand.vmem [shape: f32[8,128], index: 3, kind: output, shape index: {1}]
  %s4 = inlined_call_operand.vmem [shape: f32[8,128], index: 4, kind: output, shape index: {2}]
  %5 = xla_tuple %s2, %s3, %s4
  %s6 = sld [smem:[#allocation0]]
  $region34: #{_forward_impl.1} parent=0
    _
  %s8 = ssub.s32 1, %s6
  %s9 = scalar_select 0, %s8, %s6
  // Predicated region
  $region2: #{_forward_impl.1} parent=0 // pred_check
    _
  $region3: #{_forward_impl.1} parent=0 // pred_check_branch
    %11 = sbr.rel (0) target = $region5
  $region4: #{_forward_impl.1} parent=0 // pred_region
    _
  $region5: #{_forward_impl.1} parent=0 // pred_fallthru
    _
  // Predicated region
  $region6: #{_forward_impl.1} parent=0 // pred_check
    _
  $region7: #{_forward_impl.1} parent=0 // pred_check_branch
    %13 = sbr.rel (0) target = $region9
  $region8: #{_forward_impl.1} parent=0 // pred_region
    _
  $region9: #{_forward_impl.1} parent=0 // pred_fallthru
    _
  %v14 = vld [vmem:[%s0] sm:$0xff]
  %v15 = vld [vmem:[%s0 + $0x8] sm:$0xff]
  %v16 = vld [vmem:[%s0 + $0x10] sm:$0xff]
  %v17 = vld [vmem:[%s0 + $0x18] sm:$0xff]
  %v18 = vld [vmem:[%s1] sm:$0xff]
  %v19 = vld [vmem:[%s1 + $0x8] sm:$0xff]
  %v20 = vld [vmem:[%s1 + $0x10] sm:$0xff]
  %v21 = vld [vmem:[%s1 + $0x18] sm:$0xff]
  %v22 = vld [vmem:[%s1 + $0x20] sm:$0xff]
  %v23 = vld [vmem:[%s1 + $0x28] sm:$0xff]
  %v24 = vld [vmem:[%s1 + $0x30] sm:$0xff]
  %v25 = vld [vmem:[%s1 + $0x38] sm:$0xff]
  %v26 = vld [vmem:[%s1 + $0x40] sm:$0xff]
  %v27 = vld [vmem:[%s1 + $0x48] sm:$0xff]
  %v28 = vld [vmem:[%s1 + $0x50] sm:$0xff]
  %v29 = vld [vmem:[%s1 + $0x58] sm:$0xff]
  %v30 = vld [vmem:[%s1 + $0x60] sm:$0xff]
  %v31 = vld [vmem:[%s1 + $0x68] sm:$0xff]
  %v32 = vld [vmem:[%s1 + $0x70] sm:$0xff]
  %v33 = vld [vmem:[%s1 + $0x78] sm:$0xff]
  %v34 = vld [vmem:[%s1 + $0x80] sm:$0xff]
  %v35 = vld [vmem:[%s1 + $0x88] sm:$0xff]
  %v36 = vld [vmem:[%s1 + $0x90] sm:$0xff]
  %v37 = vld [vmem:[%s1 + $0x98] sm:$0xff]
  %v38 = vld [vmem:[%s1 + $0xa0] sm:$0xff]
  %v39 = vld [vmem:[%s1 + $0xa8] sm:$0xff]
  %v40 = vld [vmem:[%s1 + $0xb0] sm:$0xff]
  %v41 = vld [vmem:[%s1 + $0xb8] sm:$0xff]
  %v42 = vld [vmem:[%s1 + $0xc0] sm:$0xff]
  %v43 = vld [vmem:[%s1 + $0xc8] sm:$0xff]
  %v44 = vld [vmem:[%s1 + $0xd0] sm:$0xff]
  %v45 = vld [vmem:[%s1 + $0xd8] sm:$0xff]
  %v46 = vld [vmem:[%s1 + $0xe0] sm:$0xff]
  %v47 = vld [vmem:[%s1 + $0xe8] sm:$0xff]
  %v48 = vld [vmem:[%s1 + $0xf0] sm:$0xff]
  %v49 = vld [vmem:[%s1 + $0xf8] sm:$0xff]
  %v50 = vld [vmem:[%s1 + $0x100] sm:$0xff]
  %v51 = vld [vmem:[%s1 + $0x108] sm:$0xff]
  %v52 = vld [vmem:[%s1 + $0x110] sm:$0xff]
  %v53 = vld [vmem:[%s1 + $0x118] sm:$0xff]
  %v54 = vld [vmem:[%s1 + $0x120] sm:$0xff]
  %v55 = vld [vmem:[%s1 + $0x128] sm:$0xff]
  %v56 = vld [vmem:[%s1 + $0x130] sm:$0xff]
  %v57 = vld [vmem:[%s1 + $0x138] sm:$0xff]
  %v58 = vld [vmem:[%s1 + $0x140] sm:$0xff]
  %v59 = vld [vmem:[%s1 + $0x148] sm:$0xff]
  %v60 = vld [vmem:[%s1 + $0x150] sm:$0xff]
  %v61 = vld [vmem:[%s1 + $0x158] sm:$0xff]
  %v62 = vld [vmem:[%s1 + $0x160] sm:$0xff]
  %v63 = vld [vmem:[%s1 + $0x168] sm:$0xff]
  %v64 = vld [vmem:[%s1 + $0x170] sm:$0xff]
  %v65 = vld [vmem:[%s1 + $0x178] sm:$0xff]
  %v66 = vld [vmem:[%s1 + $0x180] sm:$0xff]
  %v67 = vld [vmem:[%s1 + $0x188] sm:$0xff]
  %v68 = vld [vmem:[%s1 + $0x190] sm:$0xff]
  %v69 = vld [vmem:[%s1 + $0x198] sm:$0xff]
  %v70 = vld [vmem:[%s1 + $0x1a0] sm:$0xff]
  %v71 = vld [vmem:[%s1 + $0x1a8] sm:$0xff]
  %v72 = vld [vmem:[%s1 + $0x1b0] sm:$0xff]
  %v73 = vld [vmem:[%s1 + $0x1b8] sm:$0xff]
  %v74 = vld [vmem:[%s1 + $0x1c0] sm:$0xff]
  %v75 = vld [vmem:[%s1 + $0x1c8] sm:$0xff]
  %v76 = vld [vmem:[%s1 + $0x1d0] sm:$0xff]
  %v77 = vld [vmem:[%s1 + $0x1d8] sm:$0xff]
  %v78 = vld [vmem:[%s1 + $0x1e0] sm:$0xff]
  %v79 = vld [vmem:[%s1 + $0x1e8] sm:$0xff]
  %v80 = vld [vmem:[%s1 + $0x1f0] sm:$0xff]
  %v81 = vld [vmem:[%s1 + $0x1f8] sm:$0xff]
  %82 = vmatprep.subr.mxu0 %v79
  %83 = vmatpush1.msra.mxu0 %v78
  %84 = vmatprep.subr.mxu0 %v75
  %85 = vmatpush1.msra.mxu0 %v74
  %86 = vmatprep.subr.mxu0 %v71
  %87 = vmatpush1.msra.mxu0 %v70
  %88 = vmatprep.subr.mxu0 %v67
  %89 = vmatpush1.msra.mxu0 %v66
  %90 = vmatprep.subr.mxu0 %v63
  %91 = vmatpush1.msra.mxu0 %v62
  %92 = vmatprep.subr.mxu0 %v59
  %93 = vmatpush1.msra.mxu0 %v58
  %94 = vmatprep.subr.mxu0 %v55
  %95 = vmatpush1.msra.mxu0 %v54
  %96 = vmatprep.subr.mxu0 %v51
  %97 = vmatpush1.msra.mxu0 %v50
  %98 = vmatprep.subr.mxu0 %v47
  %99 = vmatpush1.msra.mxu0 %v46
  %100 = vmatprep.subr.mxu0 %v43
  %101 = vmatpush1.msra.mxu0 %v42
  %102 = vmatprep.subr.mxu0 %v39
  %103 = vmatpush1.msra.mxu0 %v38
  %104 = vmatprep.subr.mxu0 %v35
  %105 = vmatpush1.msra.mxu0 %v34
  %106 = vmatprep.subr.mxu0 %v31
  %107 = vmatpush1.msra.mxu0 %v30
  %108 = vmatprep.subr.mxu0 %v27
  %109 = vmatpush1.msra.mxu0 %v26
  %110 = vmatprep.subr.mxu0 %v23
  %111 = vmatpush1.msra.mxu0 %v22
  %112 = vmatprep.subr.mxu0 %v19
  %113 = vmatpush1.msra.mxu0 %v18
  %114 = vmatprep.subr.mxu0 0.0
  %115 = vmatpush2.msra.mxu0 0.0
  %116 = vmatprep.subr.mxu0 0.0
  %117 = vmatpush2.msra.mxu0 0.0
  %118 = vmatprep.subr.mxu0 0.0
  %119 = vmatpush2.msra.mxu0 0.0
  %120 = vmatprep.subr.mxu0 0.0
  %121 = vmatpush2.msra.mxu0 0.0
  %122 = vmatprep.subr.mxu0 0.0
  %123 = vmatpush2.msra.mxu0 0.0
  %124 = vmatprep.subr.mxu0 0.0
  %125 = vmatpush2.msra.mxu0 0.0
  %126 = vmatprep.subr.mxu0 0.0
  %127 = vmatpush2.msra.mxu0 0.0
  %128 = vmatprep.subr.mxu0 0.0
  %129 = vmatpush2.msra.mxu0 0.0
  %130 = vmatprep.subr.mxu0 0.0
  %131 = vmatpush2.msra.mxu0 0.0
  %132 = vmatprep.subr.mxu0 0.0
  %133 = vmatpush2.msra.mxu0 0.0
  %134 = vmatprep.subr.mxu0 0.0
  %135 = vmatpush2.msra.mxu0 0.0
  %136 = vmatprep.subr.mxu0 0.0
  %137 = vmatpush2.msra.mxu0 0.0
  %138 = vmatprep.subr.mxu0 0.0
  %139 = vmatpush2.msra.mxu0 0.0
  %140 = vmatprep.subr.mxu0 0.0
  %141 = vmatpush2.msra.mxu0 0.0
  %142 = vmatprep.subr.mxu0 0.0
  %143 = vmatpush2.msra.mxu0 0.0
  %144 = vmatprep.subr.mxu0 0.0
  %145 = vmatpush2.msra.mxu0 0.0
  %146 = vmatprep.mubr.f32.mxu0 0.0
  %147 = vmatmul.mubr.f32.gmra.mxu0 0.0
  %v148 = vpop.f32.mrf.mxu0
  %v149 = vadd.f32 0.0, %v148
  %v150 = vpop.f32.mrf.mxu0
  %v151 = vadd.f32 0.0, %v150
  %152 = vdwg.mxu0
  %153 = vmatprep.subr.mxu0 %v81
  %154 = vmatpush1.msra.mxu0 %v80
  %155 = vmatprep.subr.mxu0 %v77
  %156 = vmatpush1.msra.mxu0 %v76
  %157 = vmatprep.subr.mxu0 %v73
  %158 = vmatpush1.msra.mxu0 %v72
  %159 = vmatprep.subr.mxu0 %v69
  %160 = vmatpush1.msra.mxu0 %v68
  %161 = vmatprep.subr.mxu0 %v65
  %162 = vmatpush1.msra.mxu0 %v64
  %163 = vmatprep.subr.mxu0 %v61
  %164 = vmatpush1.msra.mxu0 %v60
  %165 = vmatprep.subr.mxu0 %v57
  %166 = vmatpush1.msra.mxu0 %v56
  %167 = vmatprep.subr.mxu0 %v53
  %168 = vmatpush1.msra.mxu0 %v52
  %169 = vmatprep.subr.mxu0 %v49
  %170 = vmatpush1.msra.mxu0 %v48
  %171 = vmatprep.subr.mxu0 %v45
  %172 = vmatpush1.msra.mxu0 %v44
  %173 = vmatprep.subr.mxu0 %v41
  %174 = vmatpush1.msra.mxu0 %v40
  %175 = vmatprep.subr.mxu0 %v37
  %176 = vmatpush1.msra.mxu0 %v36
  %177 = vmatprep.subr.mxu0 %v33
  %178 = vmatpush1.msra.mxu0 %v32
  %179 = vmatprep.subr.mxu0 %v29
  %180 = vmatpush1.msra.mxu0 %v28
  %181 = vmatprep.subr.mxu0 %v25
  %182 = vmatpush1.msra.mxu0 %v24
  %183 = vmatprep.subr.mxu0 %v21
  %184 = vmatpush1.msra.mxu0 %v20
  %185 = vmatprep.subr.mxu0 0.0
  %186 = vmatpush2.msra.mxu0 0.0
  %187 = vmatprep.subr.mxu0 0.0
  %188 = vmatpush2.msra.mxu0 0.0
  %189 = vmatprep.subr.mxu0 0.0
  %190 = vmatpush2.msra.mxu0 0.0
  %191 = vmatprep.subr.mxu0 0.0
  %192 = vmatpush2.msra.mxu0 0.0
  %193 = vmatprep.subr.mxu0 0.0
  %194 = vmatpush2.msra.mxu0 0.0
  %195 = vmatprep.subr.mxu0 0.0
  %196 = vmatpush2.msra.mxu0 0.0
  %197 = vmatprep.subr.mxu0 0.0
  %198 = vmatpush2.msra.mxu0 0.0
  %199 = vmatprep.subr.mxu0 0.0
  %200 = vmatpush2.msra.mxu0 0.0
  %201 = vmatprep.subr.mxu0 0.0
  %202 = vmatpush2.msra.mxu0 0.0
  %203 = vmatprep.subr.mxu0 0.0
  %204 = vmatpush2.msra.mxu0 0.0
  %205 = vmatprep.subr.mxu0 0.0
  %206 = vmatpush2.msra.mxu0 0.0
  %207 = vmatprep.subr.mxu0 0.0
  %208 = vmatpush2.msra.mxu0 0.0
  %209 = vmatprep.subr.mxu0 0.0
  %210 = vmatpush2.msra.mxu0 0.0
  %211 = vmatprep.subr.mxu0 0.0
  %212 = vmatpush2.msra.mxu0 0.0
  %213 = vmatprep.subr.mxu0 0.0
  %214 = vmatpush2.msra.mxu0 0.0
  %215 = vmatprep.subr.mxu0 0.0
  %216 = vmatpush2.msra.mxu0 0.0
  %217 = vmatprep.mubr.f32.mxu0 0.0
  %218 = vmatmul.mubr.f32.gmra.mxu0 0.0
  %v219 = vpop.f32.mrf.mxu0
  %v220 = vadd.f32 0.0, %v219
  %v221 = vpop.f32.mrf.mxu0
  %v222 = vadd.f32 0.0, %v221
  %223 = vdwg.mxu0
  %v224 = vadd.f32 %v14, %v149
  %v225 = vadd.f32 %v15, %v151
  %v226 = vadd.f32 %v16, %v220
  %v227 = vadd.f32 %v17, %v222
  %v228 = vxor.u32 %v224, 2147483648
  %v229 = vmul.f32 %v228, 1.442695
  %v230 = vpow.pop %v229
  %v231 = vadd.f32 %v230, 1.0
  %v232 = vrcp.pop %v231
  %v233 = vmul.f32 1.0, %v232
  %v234 = vxor.u32 %v225, 2147483648
  %v235 = vmul.f32 %v234, 1.442695
  %v236 = vpow.pop %v235
  %v237 = vadd.f32 %v236, 1.0
  %v238 = vrcp.pop %v237
  %v239 = vmul.f32 1.0, %v238
  %v240 = vtanh.pop %v226
  %v241 = vxor.u32 %v227, 2147483648
  %v242 = vmul.f32 %v241, 1.442695
  %v243 = vpow.pop %v242
  %v244 = vadd.f32 %v243, 1.0
  %v245 = vrcp.pop %v244
  %v246 = vmul.f32 1.0, %v245
  %v247 = vmul.f32 %v239, 0.0
  %v248 = vmul.f32 %v233, %v240
  %v249 = vadd.f32 %v247, %v248
  %v250 = vtanh.pop %v249
  %v251 = vmul.f32 %v246, %v250
  %252 = vst [vmem:[%s2] sm:$0xff] %v251
  %s253 = scalar_lea.vmem %s0, 32
  %v254 = vld [vmem:[%s253] sm:$0xff]
  %v255 = vld [vmem:[%s253 + $0x8] sm:$0xff]
  %v256 = vld [vmem:[%s253 + $0x10] sm:$0xff]
  %v257 = vld [vmem:[%s253 + $0x18] sm:$0xff]
  %v258 = vld [vmem:[%s1] sm:$0xff]
  %v259 = vld [vmem:[%s1 + $0x8] sm:$0xff]
  %v260 = vld [vmem:[%s1 + $0x10] sm:$0xff]
  %v261 = vld [vmem:[%s1 + $0x18] sm:$0xff]
  %v262 = vld [vmem:[%s1 + $0x20] sm:$0xff]
  %v263 = vld [vmem:[%s1 + $0x28] sm:$0xff]
  %v264 = vld [vmem:[%s1 + $0x30] sm:$0xff]
  %v265 = vld [vmem:[%s1 + $0x38] sm:$0xff]
  %v266 = vld [vmem:[%s1 + $0x40] sm:$0xff]
  %v267 = vld [vmem:[%s1 + $0x48] sm:$0xff]
  %v268 = vld [vmem:[%s1 + $0x50] sm:$0xff]
  %v269 = vld [vmem:[%s1 + $0x58] sm:$0xff]
  %v270 = vld [vmem:[%s1 + $0x60] sm:$0xff]
  %v271 = vld [vmem:[%s1 + $0x68] sm:$0xff]
  %v272 = vld [vmem:[%s1 + $0x70] sm:$0xff]
  %v273 = vld [vmem:[%s1 + $0x78] sm:$0xff]
  %v274 = vld [vmem:[%s1 + $0x80] sm:$0xff]
  %v275 = vld [vmem:[%s1 + $0x88] sm:$0xff]
  %v276 = vld [vmem:[%s1 + $0x90] sm:$0xff]
  %v277 = vld [vmem:[%s1 + $0x98] sm:$0xff]
  %v278 = vld [vmem:[%s1 + $0xa0] sm:$0xff]
  %v279 = vld [vmem:[%s1 + $0xa8] sm:$0xff]
  %v280 = vld [vmem:[%s1 + $0xb0] sm:$0xff]
  %v281 = vld [vmem:[%s1 + $0xb8] sm:$0xff]
  %v282 = vld [vmem:[%s1 + $0xc0] sm:$0xff]
  %v283 = vld [vmem:[%s1 + $0xc8] sm:$0xff]
  %v284 = vld [vmem:[%s1 + $0xd0] sm:$0xff]
  %v285 = vld [vmem:[%s1 + $0xd8] sm:$0xff]
  %v286 = vld [vmem:[%s1 + $0xe0] sm:$0xff]
  %v287 = vld [vmem:[%s1 + $0xe8] sm:$0xff]
  %v288 = vld [vmem:[%s1 + $0xf0] sm:$0xff]
  %v289 = vld [vmem:[%s1 + $0xf8] sm:$0xff]
  %v290 = vld [vmem:[%s1 + $0x100] sm:$0xff]
  %v291 = vld [vmem:[%s1 + $0x108] sm:$0xff]
  %v292 = vld [vmem:[%s1 + $0x110] sm:$0xff]
  %v293 = vld [vmem:[%s1 + $0x118] sm:$0xff]
  %v294 = vld [vmem:[%s1 + $0x120] sm:$0xff]
  %v295 = vld [vmem:[%s1 + $0x128] sm:$0xff]
  %v296 = vld [vmem:[%s1 + $0x130] sm:$0xff]
  %v297 = vld [vmem:[%s1 + $0x138] sm:$0xff]
  %v298 = vld [vmem:[%s1 + $0x140] sm:$0xff]
  %v299 = vld [vmem:[%s1 + $0x148] sm:$0xff]
  %v300 = vld [vmem:[%s1 + $0x150] sm:$0xff]
  %v301 = vld [vmem:[%s1 + $0x158] sm:$0xff]
  %v302 = vld [vmem:[%s1 + $0x160] sm:$0xff]
  %v303 = vld [vmem:[%s1 + $0x168] sm:$0xff]
  %v304 = vld [vmem:[%s1 + $0x170] sm:$0xff]
  %v305 = vld [vmem:[%s1 + $0x178] sm:$0xff]
  %v306 = vld [vmem:[%s1 + $0x180] sm:$0xff]
  %v307 = vld [vmem:[%s1 + $0x188] sm:$0xff]
  %v308 = vld [vmem:[%s1 + $0x190] sm:$0xff]
  %v309 = vld [vmem:[%s1 + $0x198] sm:$0xff]
  %v310 = vld [vmem:[%s1 + $0x1a0] sm:$0xff]
  %v311 = vld [vmem:[%s1 + $0x1a8] sm:$0xff]
  %v312 = vld [vmem:[%s1 + $0x1b0] sm:$0xff]
  %v313 = vld [vmem:[%s1 + $0x1b8] sm:$0xff]
  %v314 = vld [vmem:[%s1 + $0x1c0] sm:$0xff]
  %v315 = vld [vmem:[%s1 + $0x1c8] sm:$0xff]
  %v316 = vld [vmem:[%s1 + $0x1d0] sm:$0xff]
  %v317 = vld [vmem:[%s1 + $0x1d8] sm:$0xff]
  %v318 = vld [vmem:[%s1 + $0x1e0] sm:$0xff]
  %v319 = vld [vmem:[%s1 + $0x1e8] sm:$0xff]
  %v320 = vld [vmem:[%s1 + $0x1f0] sm:$0xff]
  %v321 = vld [vmem:[%s1 + $0x1f8] sm:$0xff]
  %322 = vmatprep.subr.mxu0 %v319
  %323 = vmatpush1.msra.mxu0 %v318
  %324 = vmatprep.subr.mxu0 %v315
  %325 = vmatpush1.msra.mxu0 %v314
  %326 = vmatprep.subr.mxu0 %v311
  %327 = vmatpush1.msra.mxu0 %v310
  %328 = vmatprep.subr.mxu0 %v307
  %329 = vmatpush1.msra.mxu0 %v306
  %330 = vmatprep.subr.mxu0 %v303
  %331 = vmatpush1.msra.mxu0 %v302
  %332 = vmatprep.subr.mxu0 %v299
  %333 = vmatpush1.msra.mxu0 %v298
  %334 = vmatprep.subr.mxu0 %v295
  %335 = vmatpush1.msra.mxu0 %v294
  %336 = vmatprep.subr.mxu0 %v291
  %337 = vmatpush1.msra.mxu0 %v290
  %338 = vmatprep.subr.mxu0 %v287
  %339 = vmatpush1.msra.mxu0 %v286
  %340 = vmatprep.subr.mxu0 %v283
  %341 = vmatpush1.msra.mxu0 %v282
  %342 = vmatprep.subr.mxu0 %v279
  %343 = vmatpush1.msra.mxu0 %v278
  %344 = vmatprep.subr.mxu0 %v275
  %345 = vmatpush1.msra.mxu0 %v274
  %346 = vmatprep.subr.mxu0 %v271
  %347 = vmatpush1.msra.mxu0 %v270
  %348 = vmatprep.subr.mxu0 %v267
  %349 = vmatpush1.msra.mxu0 %v266
  %350 = vmatprep.subr.mxu0 %v263
  %351 = vmatpush1.msra.mxu0 %v262
  %352 = vmatprep.subr.mxu0 %v259
  %353 = vmatpush1.msra.mxu0 %v258
  %354 = vmatprep.subr.mxu0 0.0
  %355 = vmatpush2.msra.mxu0 0.0
  %356 = vmatprep.subr.mxu0 0.0
  %357 = vmatpush2.msra.mxu0 0.0
  %358 = vmatprep.subr.mxu0 0.0
  %359 = vmatpush2.msra.mxu0 0.0
  %360 = vmatprep.subr.mxu0 0.0
  %361 = vmatpush2.msra.mxu0 0.0
  %362 = vmatprep.subr.mxu0 0.0
  %363 = vmatpush2.msra.mxu0 0.0
  %364 = vmatprep.subr.mxu0 0.0
  %365 = vmatpush2.msra.mxu0 0.0
  %366 = vmatprep.subr.mxu0 0.0
  %367 = vmatpush2.msra.mxu0 0.0
  %368 = vmatprep.subr.mxu0 0.0
  %369 = vmatpush2.msra.mxu0 0.0
  %370 = vmatprep.subr.mxu0 0.0
  %371 = vmatpush2.msra.mxu0 0.0
  %372 = vmatprep.subr.mxu0 0.0
  %373 = vmatpush2.msra.mxu0 0.0
  %374 = vmatprep.subr.mxu0 0.0
  %375 = vmatpush2.msra.mxu0 0.0
  %376 = vmatprep.subr.mxu0 0.0
  %377 = vmatpush2.msra.mxu0 0.0
  %378 = vmatprep.subr.mxu0 0.0
  %379 = vmatpush2.msra.mxu0 0.0
  %380 = vmatprep.subr.mxu0 0.0
  %381 = vmatpush2.msra.mxu0 0.0
  %382 = vmatprep.subr.mxu0 0.0
  %383 = vmatpush2.msra.mxu0 0.0
  %384 = vmatprep.subr.mxu0 0.0
  %385 = vmatpush2.msra.mxu0 0.0
  %386 = vmatprep.mubr.f32.mxu0 0.0
  %387 = vmatmul.mubr.f32.gmra.mxu0 %v251
  %v388 = vpop.f32.mrf.mxu0
  %v389 = vadd.f32 0.0, %v388
  %v390 = vpop.f32.mrf.mxu0
  %v391 = vadd.f32 0.0, %v390
  %392 = vdwg.mxu0
  %393 = vmatprep.subr.mxu0 %v321
  %394 = vmatpush1.msra.mxu0 %v320
  %395 = vmatprep.subr.mxu0 %v317
  %396 = vmatpush1.msra.mxu0 %v316
  %397 = vmatprep.subr.mxu0 %v313
  %398 = vmatpush1.msra.mxu0 %v312
  %399 = vmatprep.subr.mxu0 %v309
  %400 = vmatpush1.msra.mxu0 %v308
  %401 = vmatprep.subr.mxu0 %v305
  %402 = vmatpush1.msra.mxu0 %v304
  %403 = vmatprep.subr.mxu0 %v301
  %404 = vmatpush1.msra.mxu0 %v300
  %405 = vmatprep.subr.mxu0 %v297
  %406 = vmatpush1.msra.mxu0 %v296
  %407 = vmatprep.subr.mxu0 %v293
  %408 = vmatpush1.msra.mxu0 %v292
  %409 = vmatprep.subr.mxu0 %v289
  %410 = vmatpush1.msra.mxu0 %v288
  %411 = vmatprep.subr.mxu0 %v285
  %412 = vmatpush1.msra.mxu0 %v284
  %413 = vmatprep.subr.mxu0 %v281
  %414 = vmatpush1.msra.mxu0 %v280
  %415 = vmatprep.subr.mxu0 %v277
  %416 = vmatpush1.msra.mxu0 %v276
  %417 = vmatprep.subr.mxu0 %v273
  %418 = vmatpush1.msra.mxu0 %v272
  %419 = vmatprep.subr.mxu0 %v269
  %420 = vmatpush1.msra.mxu0 %v268
  %421 = vmatprep.subr.mxu0 %v265
  %422 = vmatpush1.msra.mxu0 %v264
  %423 = vmatprep.subr.mxu0 %v261
  %424 = vmatpush1.msra.mxu0 %v260
  %425 = vmatprep.subr.mxu0 0.0
  %426 = vmatpush2.msra.mxu0 0.0
  %427 = vmatprep.subr.mxu0 0.0
  %428 = vmatpush2.msra.mxu0 0.0
  %429 = vmatprep.subr.mxu0 0.0
  %430 = vmatpush2.msra.mxu0 0.0
  %431 = vmatprep.subr.mxu0 0.0
  %432 = vmatpush2.msra.mxu0 0.0
  %433 = vmatprep.subr.mxu0 0.0
  %434 = vmatpush2.msra.mxu0 0.0
  %435 = vmatprep.subr.mxu0 0.0
  %436 = vmatpush2.msra.mxu0 0.0
  %437 = vmatprep.subr.mxu0 0.0
  %438 = vmatpush2.msra.mxu0 0.0
  %439 = vmatprep.subr.mxu0 0.0
  %440 = vmatpush2.msra.mxu0 0.0
  %441 = vmatprep.subr.mxu0 0.0
  %442 = vmatpush2.msra.mxu0 0.0
  %443 = vmatprep.subr.mxu0 0.0
  %444 = vmatpush2.msra.mxu0 0.0
  %445 = vmatprep.subr.mxu0 0.0
  %446 = vmatpush2.msra.mxu0 0.0
  %447 = vmatprep.subr.mxu0 0.0
  %448 = vmatpush2.msra.mxu0 0.0
  %449 = vmatprep.subr.mxu0 0.0
  %450 = vmatpush2.msra.mxu0 0.0
  %451 = vmatprep.subr.mxu0 0.0
  %452 = vmatpush2.msra.mxu0 0.0
  %453 = vmatprep.subr.mxu0 0.0
  %454 = vmatpush2.msra.mxu0 0.0
  %455 = vmatprep.subr.mxu0 0.0
  %456 = vmatpush2.msra.mxu0 0.0
  %457 = vmatprep.mubr.f32.mxu0 0.0
  %458 = vmatmul.mubr.f32.gmra.mxu0 %v251
  %v459 = vpop.f32.mrf.mxu0
  %v460 = vadd.f32 0.0, %v459
  %v461 = vpop.f32.mrf.mxu0
  %v462 = vadd.f32 0.0, %v461
  %463 = vdwg.mxu0
  %v464 = vadd.f32 %v254, %v389
  %v465 = vadd.f32 %v255, %v391
  %v466 = vadd.f32 %v256, %v460
  %v467 = vadd.f32 %v257, %v462
  %v468 = vxor.u32 %v464, 2147483648
  %v469 = vmul.f32 %v468, 1.442695
  %v470 = vpow.pop %v469
  %v471 = vadd.f32 %v470, 1.0
  %v472 = vrcp.pop %v471
  %v473 = vmul.f32 1.0, %v472
  %v474 = vxor.u32 %v465, 2147483648
  %v475 = vmul.f32 %v474, 1.442695
  %v476 = vpow.pop %v475
  %v477 = vadd.f32 %v476, 1.0
  %v478 = vrcp.pop %v477
  %v479 = vmul.f32 1.0, %v478
  %v480 = vtanh.pop %v466
  %v481 = vxor.u32 %v467, 2147483648
  %v482 = vmul.f32 %v481, 1.442695
  %v483 = vpow.pop %v482
  %v484 = vadd.f32 %v483, 1.0
  %v485 = vrcp.pop %v484
  %v486 = vmul.f32 1.0, %v485
  %v487 = vmul.f32 %v479, %v249
  %v488 = vmul.f32 %v473, %v480
  %v489 = vadd.f32 %v487, %v488
  %v490 = vtanh.pop %v489
  %v491 = vmul.f32 %v486, %v490
  %s492 = scalar_lea.vmem %s2, 8
  %493 = vst [vmem:[%s492] sm:$0xff] %v491
  %s494 = scalar_lea.vmem %s0, 64
  %v495 = vld [vmem:[%s494] sm:$0xff]
  %v496 = vld [vmem:[%s494 + $0x8] sm:$0xff]
  %v497 = vld [vmem:[%s494 + $0x10] sm:$0xff]
  %v498 = vld [vmem:[%s494 + $0x18] sm:$0xff]
  %v499 = vld [vmem:[%s1] sm:$0xff]
  %v500 = vld [vmem:[%s1 + $0x8] sm:$0xff]
  %v501 = vld [vmem:[%s1 + $0x10] sm:$0xff]
  %v502 = vld [vmem:[%s1 + $0x18] sm:$0xff]
  %v503 = vld [vmem:[%s1 + $0x20] sm:$0xff]
  %v504 = vld [vmem:[%s1 + $0x28] sm:$0xff]
  %v505 = vld [vmem:[%s1 + $0x30] sm:$0xff]
  %v506 = vld [vmem:[%s1 + $0x38] sm:$0xff]
  %v507 = vld [vmem:[%s1 + $0x40] sm:$0xff]
  %v508 = vld [vmem:[%s1 + $0x48] sm:$0xff]
  %v509 = vld [vmem:[%s1 + $0x50] sm:$0xff]
  %v510 = vld [vmem:[%s1 + $0x58] sm:$0xff]
  %v511 = vld [vmem:[%s1 + $0x60] sm:$0xff]
  %v512 = vld [vmem:[%s1 + $0x68] sm:$0xff]
  %v513 = vld [vmem:[%s1 + $0x70] sm:$0xff]
  %v514 = vld [vmem:[%s1 + $0x78] sm:$0xff]
  %v515 = vld [vmem:[%s1 + $0x80] sm:$0xff]
  %v516 = vld [vmem:[%s1 + $0x88] sm:$0xff]
  %v517 = vld [vmem:[%s1 + $0x90] sm:$0xff]
  %v518 = vld [vmem:[%s1 + $0x98] sm:$0xff]
  %v519 = vld [vmem:[%s1 + $0xa0] sm:$0xff]
  %v520 = vld [vmem:[%s1 + $0xa8] sm:$0xff]
  %v521 = vld [vmem:[%s1 + $0xb0] sm:$0xff]
  %v522 = vld [vmem:[%s1 + $0xb8] sm:$0xff]
  %v523 = vld [vmem:[%s1 + $0xc0] sm:$0xff]
  %v524 = vld [vmem:[%s1 + $0xc8] sm:$0xff]
  %v525 = vld [vmem:[%s1 + $0xd0] sm:$0xff]
  %v526 = vld [vmem:[%s1 + $0xd8] sm:$0xff]
  %v527 = vld [vmem:[%s1 + $0xe0] sm:$0xff]
  %v528 = vld [vmem:[%s1 + $0xe8] sm:$0xff]
  %v529 = vld [vmem:[%s1 + $0xf0] sm:$0xff]
  %v530 = vld [vmem:[%s1 + $0xf8] sm:$0xff]
  %v531 = vld [vmem:[%s1 + $0x100] sm:$0xff]
  %v532 = vld [vmem:[%s1 + $0x108] sm:$0xff]
  %v533 = vld [vmem:[%s1 + $0x110] sm:$0xff]
  %v534 = vld [vmem:[%s1 + $0x118] sm:$0xff]
  %v535 = vld [vmem:[%s1 + $0x120] sm:$0xff]
  %v536 = vld [vmem:[%s1 + $0x128] sm:$0xff]
  %v537 = vld [vmem:[%s1 + $0x130] sm:$0xff]
  %v538 = vld [vmem:[%s1 + $0x138] sm:$0xff]
  %v539 = vld [vmem:[%s1 + $0x140] sm:$0xff]
  %v540 = vld [vmem:[%s1 + $0x148] sm:$0xff]
  %v541 = vld [vmem:[%s1 + $0x150] sm:$0xff]
  %v542 = vld [vmem:[%s1 + $0x158] sm:$0xff]
  %v543 = vld [vmem:[%s1 + $0x160] sm:$0xff]
  %v544 = vld [vmem:[%s1 + $0x168] sm:$0xff]
  %v545 = vld [vmem:[%s1 + $0x170] sm:$0xff]
  %v546 = vld [vmem:[%s1 + $0x178] sm:$0xff]
  %v547 = vld [vmem:[%s1 + $0x180] sm:$0xff]
  %v548 = vld [vmem:[%s1 + $0x188] sm:$0xff]
  %v549 = vld [vmem:[%s1 + $0x190] sm:$0xff]
  %v550 = vld [vmem:[%s1 + $0x198] sm:$0xff]
  %v551 = vld [vmem:[%s1 + $0x1a0] sm:$0xff]
  %v552 = vld [vmem:[%s1 + $0x1a8] sm:$0xff]
  %v553 = vld [vmem:[%s1 + $0x1b0] sm:$0xff]
  %v554 = vld [vmem:[%s1 + $0x1b8] sm:$0xff]
  %v555 = vld [vmem:[%s1 + $0x1c0] sm:$0xff]
  %v556 = vld [vmem:[%s1 + $0x1c8] sm:$0xff]
  %v557 = vld [vmem:[%s1 + $0x1d0] sm:$0xff]
  %v558 = vld [vmem:[%s1 + $0x1d8] sm:$0xff]
  %v559 = vld [vmem:[%s1 + $0x1e0] sm:$0xff]
  %v560 = vld [vmem:[%s1 + $0x1e8] sm:$0xff]
  %v561 = vld [vmem:[%s1 + $0x1f0] sm:$0xff]
  %v562 = vld [vmem:[%s1 + $0x1f8] sm:$0xff]
  %563 = vmatprep.subr.mxu0 %v560
  %564 = vmatpush1.msra.mxu0 %v559
  %565 = vmatprep.subr.mxu0 %v556
  %566 = vmatpush1.msra.mxu0 %v555
  %567 = vmatprep.subr.mxu0 %v552
  %568 = vmatpush1.msra.mxu0 %v551
  %569 = vmatprep.subr.mxu0 %v548
  %570 = vmatpush1.msra.mxu0 %v547
  %571 = vmatprep.subr.mxu0 %v544
  %572 = vmatpush1.msra.mxu0 %v543
  %573 = vmatprep.subr.mxu0 %v540
  %574 = vmatpush1.msra.mxu0 %v539
  %575 = vmatprep.subr.mxu0 %v536
  %576 = vmatpush1.msra.mxu0 %v535
  %577 = vmatprep.subr.mxu0 %v532
  %578 = vmatpush1.msra.mxu0 %v531
  %579 = vmatprep.subr.mxu0 %v528
  %580 = vmatpush1.msra.mxu0 %v527
  %581 = vmatprep.subr.mxu0 %v524
  %582 = vmatpush1.msra.mxu0 %v523
  %583 = vmatprep.subr.mxu0 %v520
  %584 = vmatpush1.msra.mxu0 %v519
  %585 = vmatprep.subr.mxu0 %v516
  %586 = vmatpush1.msra.mxu0 %v515
  %587 = vmatprep.subr.mxu0 %v512
  %588 = vmatpush1.msra.mxu0 %v511
  %589 = vmatprep.subr.mxu0 %v508
  %590 = vmatpush1.msra.mxu0 %v507
  %591 = vmatprep.subr.mxu0 %v504
  %592 = vmatpush1.msra.mxu0 %v503
  %593 = vmatprep.subr.mxu0 %v500
  %594 = vmatpush1.msra.mxu0 %v499
  %595 = vmatprep.subr.mxu0 0.0
  %596 = vmatpush2.msra.mxu0 0.0
  %597 = vmatprep.subr.mxu0 0.0
  %598 = vmatpush2.msra.mxu0 0.0
  %599 = vmatprep.subr.mxu0 0.0
  %600 = vmatpush2.msra.mxu0 0.0
  %601 = vmatprep.subr.mxu0 0.0
  %602 = vmatpush2.msra.mxu0 0.0
  %603 = vmatprep.subr.mxu0 0.0
  %604 = vmatpush2.msra.mxu0 0.0
  %605 = vmatprep.subr.mxu0 0.0
  %606 = vmatpush2.msra.mxu0 0.0
  %607 = vmatprep.subr.mxu0 0.0
  %608 = vmatpush2.msra.mxu0 0.0
  %609 = vmatprep.subr.mxu0 0.0
  %610 = vmatpush2.msra.mxu0 0.0
  %611 = vmatprep.subr.mxu0 0.0
  %612 = vmatpush2.msra.mxu0 0.0
  %613 = vmatprep.subr.mxu0 0.0
  %614 = vmatpush2.msra.mxu0 0.0
  %615 = vmatprep.subr.mxu0 0.0
  %616 = vmatpush2.msra.mxu0 0.0
  %617 = vmatprep.subr.mxu0 0.0
  %618 = vmatpush2.msra.mxu0 0.0
  %619 = vmatprep.subr.mxu0 0.0
  %620 = vmatpush2.msra.mxu0 0.0
  %621 = vmatprep.subr.mxu0 0.0
  %622 = vmatpush2.msra.mxu0 0.0
  %623 = vmatprep.subr.mxu0 0.0
  %624 = vmatpush2.msra.mxu0 0.0
  %625 = vmatprep.subr.mxu0 0.0
  %626 = vmatpush2.msra.mxu0 0.0
  %627 = vmatprep.mubr.f32.mxu0 0.0
  %628 = vmatmul.mubr.f32.gmra.mxu0 %v491
  %v629 = vpop.f32.mrf.mxu0
  %v630 = vadd.f32 0.0, %v629
  %v631 = vpop.f32.mrf.mxu0
  %v632 = vadd.f32 0.0, %v631
  %633 = vdwg.mxu0
  %634 = vmatprep.subr.mxu0 %v562
  %635 = vmatpush1.msra.mxu0 %v561
  %636 = vmatprep.subr.mxu0 %v558
  %637 = vmatpush1.msra.mxu0 %v557
  %638 = vmatprep.subr.mxu0 %v554
  %639 = vmatpush1.msra.mxu0 %v553
  %640 = vmatprep.subr.mxu0 %v550
  %641 = vmatpush1.msra.mxu0 %v549
  %642 = vmatprep.subr.mxu0 %v546
  %643 = vmatpush1.msra.mxu0 %v545
  %644 = vmatprep.subr.mxu0 %v542
  %645 = vmatpush1.msra.mxu0 %v541
  %646 = vmatprep.subr.mxu0 %v538
  %647 = vmatpush1.msra.mxu0 %v537
  %648 = vmatprep.subr.mxu0 %v534
  %649 = vmatpush1.msra.mxu0 %v533
  %650 = vmatprep.subr.mxu0 %v530
  %651 = vmatpush1.msra.mxu0 %v529
  %652 = vmatprep.subr.mxu0 %v526
  %653 = vmatpush1.msra.mxu0 %v525
  %654 = vmatprep.subr.mxu0 %v522
  %655 = vmatpush1.msra.mxu0 %v521
  %656 = vmatprep.subr.mxu0 %v518
  %657 = vmatpush1.msra.mxu0 %v517
  %658 = vmatprep.subr.mxu0 %v514
  %659 = vmatpush1.msra.mxu0 %v513
  %660 = vmatprep.subr.mxu0 %v510
  %661 = vmatpush1.msra.mxu0 %v509
  %662 = vmatprep.subr.mxu0 %v506
  %663 = vmatpush1.msra.mxu0 %v505
  %664 = vmatprep.subr.mxu0 %v502
  %665 = vmatpush1.msra.mxu0 %v501
  %666 = vmatprep.subr.mxu0 0.0
  %667 = vmatpush2.msra.mxu0 0.0
  %668 = vmatprep.subr.mxu0 0.0
  %669 = vmatpush2.msra.mxu0 0.0
  %670 = vmatprep.subr.mxu0 0.0
  %671 = vmatpush2.msra.mxu0 0.0
  %672 = vmatprep.subr.mxu0 0.0
  %673 = vmatpush2.msra.mxu0 0.0
  %674 = vmatprep.subr.mxu0 0.0
  %675 = vmatpush2.msra.mxu0 0.0
  %676 = vmatprep.subr.mxu0 0.0
  %677 = vmatpush2.msra.mxu0 0.0
  %678 = vmatprep.subr.mxu0 0.0
  %679 = vmatpush2.msra.mxu0 0.0
  %680 = vmatprep.subr.mxu0 0.0
  %681 = vmatpush2.msra.mxu0 0.0
  %682 = vmatprep.subr.mxu0 0.0
  %683 = vmatpush2.msra.mxu0 0.0
  %684 = vmatprep.subr.mxu0 0.0
  %685 = vmatpush2.msra.mxu0 0.0
  %686 = vmatprep.subr.mxu0 0.0
  %687 = vmatpush2.msra.mxu0 0.0
  %688 = vmatprep.subr.mxu0 0.0
  %689 = vmatpush2.msra.mxu0 0.0
  %690 = vmatprep.subr.mxu0 0.0
  %691 = vmatpush2.msra.mxu0 0.0
  %692 = vmatprep.subr.mxu0 0.0
  %693 = vmatpush2.msra.mxu0 0.0
  %694 = vmatprep.subr.mxu0 0.0
  %695 = vmatpush2.msra.mxu0 0.0
  %696 = vmatprep.subr.mxu0 0.0
  %697 = vmatpush2.msra.mxu0 0.0
  %698 = vmatprep.mubr.f32.mxu0 0.0
  %699 = vmatmul.mubr.f32.gmra.mxu0 %v491
  %v700 = vpop.f32.mrf.mxu0
  %v701 = vadd.f32 0.0, %v700
  %v702 = vpop.f32.mrf.mxu0
  %v703 = vadd.f32 0.0, %v702
  %704 = vdwg.mxu0
  %v705 = vadd.f32 %v495, %v630
  %v706 = vadd.f32 %v496, %v632
  %v707 = vadd.f32 %v497, %v701
  %v708 = vadd.f32 %v498, %v703
  %v709 = vxor.u32 %v705, 2147483648
  %v710 = vmul.f32 %v709, 1.442695
  %v711 = vpow.pop %v710
  %v712 = vadd.f32 %v711, 1.0
  %v713 = vrcp.pop %v712
  %v714 = vmul.f32 1.0, %v713
  %v715 = vxor.u32 %v706, 2147483648
  %v716 = vmul.f32 %v715, 1.442695
  %v717 = vpow.pop %v716
  %v718 = vadd.f32 %v717, 1.0
  %v719 = vrcp.pop %v718
  %v720 = vmul.f32 1.0, %v719
  %v721 = vtanh.pop %v707
  %v722 = vxor.u32 %v708, 2147483648
  %v723 = vmul.f32 %v722, 1.442695
  %v724 = vpow.pop %v723
  %v725 = vadd.f32 %v724, 1.0
  %v726 = vrcp.pop %v725
  %v727 = vmul.f32 1.0, %v726
  %v728 = vmul.f32 %v720, %v489
  %v729 = vmul.f32 %v714, %v721
  %v730 = vadd.f32 %v728, %v729
  %v731 = vtanh.pop %v730
  %v732 = vmul.f32 %v727, %v731
  %s733 = scalar_lea.vmem %s2, 16
  %734 = vst [vmem:[%s733] sm:$0xff] %v732
  %s735 = scalar_lea.vmem %s0, 96
  %v736 = vld [vmem:[%s735] sm:$0xff]
  %v737 = vld [vmem:[%s735 + $0x8] sm:$0xff]
  %v738 = vld [vmem:[%s735 + $0x10] sm:$0xff]
  %v739 = vld [vmem:[%s735 + $0x18] sm:$0xff]
  %v740 = vld [vmem:[%s1] sm:$0xff]
  %v741 = vld [vmem:[%s1 + $0x8] sm:$0xff]
  %v742 = vld [vmem:[%s1 + $0x10] sm:$0xff]
  %v743 = vld [vmem:[%s1 + $0x18] sm:$0xff]
  %v744 = vld [vmem:[%s1 + $0x20] sm:$0xff]
  %v745 = vld [vmem:[%s1 + $0x28] sm:$0xff]
  %v746 = vld [vmem:[%s1 + $0x30] sm:$0xff]
  %v747 = vld [vmem:[%s1 + $0x38] sm:$0xff]
  %v748 = vld [vmem:[%s1 + $0x40] sm:$0xff]
  %v749 = vld [vmem:[%s1 + $0x48] sm:$0xff]
  %v750 = vld [vmem:[%s1 + $0x50] sm:$0xff]
  %v751 = vld [vmem:[%s1 + $0x58] sm:$0xff]
  %v752 = vld [vmem:[%s1 + $0x60] sm:$0xff]
  %v753 = vld [vmem:[%s1 + $0x68] sm:$0xff]
  %v754 = vld [vmem:[%s1 + $0x70] sm:$0xff]
  %v755 = vld [vmem:[%s1 + $0x78] sm:$0xff]
  %v756 = vld [vmem:[%s1 + $0x80] sm:$0xff]
  %v757 = vld [vmem:[%s1 + $0x88] sm:$0xff]
  %v758 = vld [vmem:[%s1 + $0x90] sm:$0xff]
  %v759 = vld [vmem:[%s1 + $0x98] sm:$0xff]
  %v760 = vld [vmem:[%s1 + $0xa0] sm:$0xff]
  %v761 = vld [vmem:[%s1 + $0xa8] sm:$0xff]
  %v762 = vld [vmem:[%s1 + $0xb0] sm:$0xff]
  %v763 = vld [vmem:[%s1 + $0xb8] sm:$0xff]
  %v764 = vld [vmem:[%s1 + $0xc0] sm:$0xff]
  %v765 = vld [vmem:[%s1 + $0xc8] sm:$0xff]
  %v766 = vld [vmem:[%s1 + $0xd0] sm:$0xff]
  %v767 = vld [vmem:[%s1 + $0xd8] sm:$0xff]
  %v768 = vld [vmem:[%s1 + $0xe0] sm:$0xff]
  %v769 = vld [vmem:[%s1 + $0xe8] sm:$0xff]
  %v770 = vld [vmem:[%s1 + $0xf0] sm:$0xff]
  %v771 = vld [vmem:[%s1 + $0xf8] sm:$0xff]
  %v772 = vld [vmem:[%s1 + $0x100] sm:$0xff]
  %v773 = vld [vmem:[%s1 + $0x108] sm:$0xff]
  %v774 = vld [vmem:[%s1 + $0x110] sm:$0xff]
  %v775 = vld [vmem:[%s1 + $0x118] sm:$0xff]
  %v776 = vld [vmem:[%s1 + $0x120] sm:$0xff]
  %v777 = vld [vmem:[%s1 + $0x128] sm:$0xff]
  %v778 = vld [vmem:[%s1 + $0x130] sm:$0xff]
  %v779 = vld [vmem:[%s1 + $0x138] sm:$0xff]
  %v780 = vld [vmem:[%s1 + $0x140] sm:$0xff]
  %v781 = vld [vmem:[%s1 + $0x148] sm:$0xff]
  %v782 = vld [vmem:[%s1 + $0x150] sm:$0xff]
  %v783 = vld [vmem:[%s1 + $0x158] sm:$0xff]
  %v784 = vld [vmem:[%s1 + $0x160] sm:$0xff]
  %v785 = vld [vmem:[%s1 + $0x168] sm:$0xff]
  %v786 = vld [vmem:[%s1 + $0x170] sm:$0xff]
  %v787 = vld [vmem:[%s1 + $0x178] sm:$0xff]
  %v788 = vld [vmem:[%s1 + $0x180] sm:$0xff]
  %v789 = vld [vmem:[%s1 + $0x188] sm:$0xff]
  %v790 = vld [vmem:[%s1 + $0x190] sm:$0xff]
  %v791 = vld [vmem:[%s1 + $0x198] sm:$0xff]
  %v792 = vld [vmem:[%s1 + $0x1a0] sm:$0xff]
  %v793 = vld [vmem:[%s1 + $0x1a8] sm:$0xff]
  %v794 = vld [vmem:[%s1 + $0x1b0] sm:$0xff]
  %v795 = vld [vmem:[%s1 + $0x1b8] sm:$0xff]
  %v796 = vld [vmem:[%s1 + $0x1c0] sm:$0xff]
  %v797 = vld [vmem:[%s1 + $0x1c8] sm:$0xff]
  %v798 = vld [vmem:[%s1 + $0x1d0] sm:$0xff]
  %v799 = vld [vmem:[%s1 + $0x1d8] sm:$0xff]
  %v800 = vld [vmem:[%s1 + $0x1e0] sm:$0xff]
  %v801 = vld [vmem:[%s1 + $0x1e8] sm:$0xff]
  %v802 = vld [vmem:[%s1 + $0x1f0] sm:$0xff]
  %v803 = vld [vmem:[%s1 + $0x1f8] sm:$0xff]
  %804 = vmatprep.subr.mxu0 %v801
  %805 = vmatpush1.msra.mxu0 %v800
  %806 = vmatprep.subr.mxu0 %v797
  %807 = vmatpush1.msra.mxu0 %v796
  %808 = vmatprep.subr.mxu0 %v793
  %809 = vmatpush1.msra.mxu0 %v792
  %810 = vmatprep.subr.mxu0 %v789
  %811 = vmatpush1.msra.mxu0 %v788
  %812 = vmatprep.subr.mxu0 %v785
  %813 = vmatpush1.msra.mxu0 %v784
  %814 = vmatprep.subr.mxu0 %v781
  %815 = vmatpush1.msra.mxu0 %v780
  %816 = vmatprep.subr.mxu0 %v777
  %817 = vmatpush1.msra.mxu0 %v776
  %818 = vmatprep.subr.mxu0 %v773
  %819 = vmatpush1.msra.mxu0 %v772
  %820 = vmatprep.subr.mxu0 %v769
  %821 = vmatpush1.msra.mxu0 %v768
  %822 = vmatprep.subr.mxu0 %v765
  %823 = vmatpush1.msra.mxu0 %v764
  %824 = vmatprep.subr.mxu0 %v761
  %825 = vmatpush1.msra.mxu0 %v760
  %826 = vmatprep.subr.mxu0 %v757
  %827 = vmatpush1.msra.mxu0 %v756
  %828 = vmatprep.subr.mxu0 %v753
  %829 = vmatpush1.msra.mxu0 %v752
  %830 = vmatprep.subr.mxu0 %v749
  %831 = vmatpush1.msra.mxu0 %v748
  %832 = vmatprep.subr.mxu0 %v745
  %833 = vmatpush1.msra.mxu0 %v744
  %834 = vmatprep.subr.mxu0 %v741
  %835 = vmatpush1.msra.mxu0 %v740
  %836 = vmatprep.subr.mxu0 0.0
  %837 = vmatpush2.msra.mxu0 0.0
  %838 = vmatprep.subr.mxu0 0.0
  %839 = vmatpush2.msra.mxu0 0.0
  %840 = vmatprep.subr.mxu0 0.0
  %841 = vmatpush2.msra.mxu0 0.0
  %842 = vmatprep.subr.mxu0 0.0
  %843 = vmatpush2.msra.mxu0 0.0
  %844 = vmatprep.subr.mxu0 0.0
  %845 = vmatpush2.msra.mxu0 0.0
  %846 = vmatprep.subr.mxu0 0.0
  %847 = vmatpush2.msra.mxu0 0.0
  %848 = vmatprep.subr.mxu0 0.0
  %849 = vmatpush2.msra.mxu0 0.0
  %850 = vmatprep.subr.mxu0 0.0
  %851 = vmatpush2.msra.mxu0 0.0
  %852 = vmatprep.subr.mxu0 0.0
  %853 = vmatpush2.msra.mxu0 0.0
  %854 = vmatprep.subr.mxu0 0.0
  %855 = vmatpush2.msra.mxu0 0.0
  %856 = vmatprep.subr.mxu0 0.0
  %857 = vmatpush2.msra.mxu0 0.0
  %858 = vmatprep.subr.mxu0 0.0
  %859 = vmatpush2.msra.mxu0 0.0
  %860 = vmatprep.subr.mxu0 0.0
  %861 = vmatpush2.msra.mxu0 0.0
  %862 = vmatprep.subr.mxu0 0.0
  %863 = vmatpush2.msra.mxu0 0.0
  %864 = vmatprep.subr.mxu0 0.0
  %865 = vmatpush2.msra.mxu0 0.0
  %866 = vmatprep.subr.mxu0 0.0
  %867 = vmatpush2.msra.mxu0 0.0
  %868 = vmatprep.mubr.f32.mxu0 0.0
  %869 = vmatmul.mubr.f32.gmra.mxu0 %v732
  %v870 = vpop.f32.mrf.mxu0
  %v871 = vadd.f32 0.0, %v870
  %v872 = vpop.f32.mrf.mxu0
  %v873 = vadd.f32 0.0, %v872
  %874 = vdwg.mxu0
  %875 = vmatprep.subr.mxu0 %v803
  %876 = vmatpush1.msra.mxu0 %v802
  %877 = vmatprep.subr.mxu0 %v799
  %878 = vmatpush1.msra.mxu0 %v798
  %879 = vmatprep.subr.mxu0 %v795
  %880 = vmatpush1.msra.mxu0 %v794
  %881 = vmatprep.subr.mxu0 %v791
  %882 = vmatpush1.msra.mxu0 %v790
  %883 = vmatprep.subr.mxu0 %v787
  %884 = vmatpush1.msra.mxu0 %v786
  %885 = vmatprep.subr.mxu0 %v783
  %886 = vmatpush1.msra.mxu0 %v782
  %887 = vmatprep.subr.mxu0 %v779
  %888 = vmatpush1.msra.mxu0 %v778
  %889 = vmatprep.subr.mxu0 %v775
  %890 = vmatpush1.msra.mxu0 %v774
  %891 = vmatprep.subr.mxu0 %v771
  %892 = vmatpush1.msra.mxu0 %v770
  %893 = vmatprep.subr.mxu0 %v767
  %894 = vmatpush1.msra.mxu0 %v766
  %895 = vmatprep.subr.mxu0 %v763
  %896 = vmatpush1.msra.mxu0 %v762
  %897 = vmatprep.subr.mxu0 %v759
  %898 = vmatpush1.msra.mxu0 %v758
  %899 = vmatprep.subr.mxu0 %v755
  %900 = vmatpush1.msra.mxu0 %v754
  %901 = vmatprep.subr.mxu0 %v751
  %902 = vmatpush1.msra.mxu0 %v750
  %903 = vmatprep.subr.mxu0 %v747
  %904 = vmatpush1.msra.mxu0 %v746
  %905 = vmatprep.subr.mxu0 %v743
  %906 = vmatpush1.msra.mxu0 %v742
  %907 = vmatprep.subr.mxu0 0.0
  %908 = vmatpush2.msra.mxu0 0.0
  %909 = vmatprep.subr.mxu0 0.0
  %910 = vmatpush2.msra.mxu0 0.0
  %911 = vmatprep.subr.mxu0 0.0
  %912 = vmatpush2.msra.mxu0 0.0
  %913 = vmatprep.subr.mxu0 0.0
  %914 = vmatpush2.msra.mxu0 0.0
  %915 = vmatprep.subr.mxu0 0.0
  %916 = vmatpush2.msra.mxu0 0.0
  %917 = vmatprep.subr.mxu0 0.0
  %918 = vmatpush2.msra.mxu0 0.0
  %919 = vmatprep.subr.mxu0 0.0
  %920 = vmatpush2.msra.mxu0 0.0
  %921 = vmatprep.subr.mxu0 0.0
  %922 = vmatpush2.msra.mxu0 0.0
  %923 = vmatprep.subr.mxu0 0.0
  %924 = vmatpush2.msra.mxu0 0.0
  %925 = vmatprep.subr.mxu0 0.0
  %926 = vmatpush2.msra.mxu0 0.0
  %927 = vmatprep.subr.mxu0 0.0
  %928 = vmatpush2.msra.mxu0 0.0
  %929 = vmatprep.subr.mxu0 0.0
  %930 = vmatpush2.msra.mxu0 0.0
  %931 = vmatprep.subr.mxu0 0.0
  %932 = vmatpush2.msra.mxu0 0.0
  %933 = vmatprep.subr.mxu0 0.0
  %934 = vmatpush2.msra.mxu0 0.0
  %935 = vmatprep.subr.mxu0 0.0
  %936 = vmatpush2.msra.mxu0 0.0
  %937 = vmatprep.subr.mxu0 0.0
  %938 = vmatpush2.msra.mxu0 0.0
  %939 = vmatprep.mubr.f32.mxu0 0.0
  %940 = vmatmul.mubr.f32.gmra.mxu0 %v732
  %v941 = vpop.f32.mrf.mxu0
  %v942 = vadd.f32 0.0, %v941
  %v943 = vpop.f32.mrf.mxu0
  %v944 = vadd.f32 0.0, %v943
  %945 = vdwg.mxu0
  %v946 = vadd.f32 %v736, %v871
  %v947 = vadd.f32 %v737, %v873
  %v948 = vadd.f32 %v738, %v942
  %v949 = vadd.f32 %v739, %v944
  %v950 = vxor.u32 %v946, 2147483648
  %v951 = vmul.f32 %v950, 1.442695
  %v952 = vpow.pop %v951
  %v953 = vadd.f32 %v952, 1.0
  %v954 = vrcp.pop %v953
  %v955 = vmul.f32 1.0, %v954
  %v956 = vxor.u32 %v947, 2147483648
  %v957 = vmul.f32 %v956, 1.442695
  %v958 = vpow.pop %v957
  %v959 = vadd.f32 %v958, 1.0
  %v960 = vrcp.pop %v959
  %v961 = vmul.f32 1.0, %v960
  %v962 = vtanh.pop %v948
  %v963 = vxor.u32 %v949, 2147483648
  %v964 = vmul.f32 %v963, 1.442695
  %v965 = vpow.pop %v964
  %v966 = vadd.f32 %v965, 1.0
  %v967 = vrcp.pop %v966
  %v968 = vmul.f32 1.0, %v967
  %v969 = vmul.f32 %v961, %v730
  %v970 = vmul.f32 %v955, %v962
  %v971 = vadd.f32 %v969, %v970
  %v972 = vtanh.pop %v971
  %v973 = vmul.f32 %v968, %v972
  %s974 = scalar_lea.vmem %s2, 24
  %975 = vst [vmem:[%s974] sm:$0xff] %v973
  %s976 = scalar_lea.vmem %s0, 128
  %v977 = vld [vmem:[%s976] sm:$0xff]
  %v978 = vld [vmem:[%s976 + $0x8] sm:$0xff]
  %v979 = vld [vmem:[%s976 + $0x10] sm:$0xff]
  %v980 = vld [vmem:[%s976 + $0x18] sm:$0xff]
  %v981 = vld [vmem:[%s1] sm:$0xff]
  %v982 = vld [vmem:[%s1 + $0x8] sm:$0xff]
  %v983 = vld [vmem:[%s1 + $0x10] sm:$0xff]
  %v984 = vld [vmem:[%s1 + $0x18] sm:$0xff]
  %v985 = vld [vmem:[%s1 + $0x20] sm:$0xff]
  %v986 = vld [vmem:[%s1 + $0x28] sm:$0xff]
  %v987 = vld [vmem:[%s1 + $0x30] sm:$0xff]
  %v988 = vld [vmem:[%s1 + $0x38] sm:$0xff]
  %v989 = vld [vmem:[%s1 + $0x40] sm:$0xff]
  %v990 = vld [vmem:[%s1 + $0x48] sm:$0xff]
  %v991 = vld [vmem:[%s1 + $0x50] sm:$0xff]
  %v992 = vld [vmem:[%s1 + $0x58] sm:$0xff]
  %v993 = vld [vmem:[%s1 + $0x60] sm:$0xff]
  %v994 = vld [vmem:[%s1 + $0x68] sm:$0xff]
  %v995 = vld [vmem:[%s1 + $0x70] sm:$0xff]
  %v996 = vld [vmem:[%s1 + $0x78] sm:$0xff]
  %v997 = vld [vmem:[%s1 + $0x80] sm:$0xff]
  %v998 = vld [vmem:[%s1 + $0x88] sm:$0xff]
  %v999 = vld [vmem:[%s1 + $0x90] sm:$0xff]
  %v1000 = vld [vmem:[%s1 + $0x98] sm:$0xff]
  %v1001 = vld [vmem:[%s1 + $0xa0] sm:$0xff]
  %v1002 = vld [vmem:[%s1 + $0xa8] sm:$0xff]
  %v1003 = vld [vmem:[%s1 + $0xb0] sm:$0xff]
  %v1004 = vld [vmem:[%s1 + $0xb8] sm:$0xff]
  %v1005 = vld [vmem:[%s1 + $0xc0] sm:$0xff]
  %v1006 = vld [vmem:[%s1 + $0xc8] sm:$0xff]
  %v1007 = vld [vmem:[%s1 + $0xd0] sm:$0xff]
  %v1008 = vld [vmem:[%s1 + $0xd8] sm:$0xff]
  %v1009 = vld [vmem:[%s1 + $0xe0] sm:$0xff]
  %v1010 = vld [vmem:[%s1 + $0xe8] sm:$0xff]
  %v1011 = vld [vmem:[%s1 + $0xf0] sm:$0xff]
  %v1012 = vld [vmem:[%s1 + $0xf8] sm:$0xff]
  %v1013 = vld [vmem:[%s1 + $0x100] sm:$0xff]
  %v1014 = vld [vmem:[%s1 + $0x108] sm:$0xff]
  %v1015 = vld [vmem:[%s1 + $0x110] sm:$0xff]
  %v1016 = vld [vmem:[%s1 + $0x118] sm:$0xff]
  %v1017 = vld [vmem:[%s1 + $0x120] sm:$0xff]
  %v1018 = vld [vmem:[%s1 + $0x128] sm:$0xff]
  %v1019 = vld [vmem:[%s1 + $0x130] sm:$0xff]
  %v1020 = vld [vmem:[%s1 + $0x138] sm:$0xff]
  %v1021 = vld [vmem:[%s1 + $0x140] sm:$0xff]
  %v1022 = vld [vmem:[%s1 + $0x148] sm:$0xff]
  %v1023 = vld [vmem:[%s1 + $0x150] sm:$0xff]
  %v1024 = vld [vmem:[%s1 + $0x158] sm:$0xff]
  %v1025 = vld [vmem:[%s1 + $0x160] sm:$0xff]
  %v1026 = vld [vmem:[%s1 + $0x168] sm:$0xff]
  %v1027 = vld [vmem:[%s1 + $0x170] sm:$0xff]
  %v1028 = vld [vmem:[%s1 + $0x178] sm:$0xff]
  %v1029 = vld [vmem:[%s1 + $0x180] sm:$0xff]
  %v1030 = vld [vmem:[%s1 + $0x188] sm:$0xff]
  %v1031 = vld [vmem:[%s1 + $0x190] sm:$0xff]
  %v1032 = vld [vmem:[%s1 + $0x198] sm:$0xff]
  %v1033 = vld [vmem:[%s1 + $0x1a0] sm:$0xff]
  %v1034 = vld [vmem:[%s1 + $0x1a8] sm:$0xff]
  %v1035 = vld [vmem:[%s1 + $0x1b0] sm:$0xff]
  %v1036 = vld [vmem:[%s1 + $0x1b8] sm:$0xff]
  %v1037 = vld [vmem:[%s1 + $0x1c0] sm:$0xff]
  %v1038 = vld [vmem:[%s1 + $0x1c8] sm:$0xff]
  %v1039 = vld [vmem:[%s1 + $0x1d0] sm:$0xff]
  %v1040 = vld [vmem:[%s1 + $0x1d8] sm:$0xff]
  %v1041 = vld [vmem:[%s1 + $0x1e0] sm:$0xff]
  %v1042 = vld [vmem:[%s1 + $0x1e8] sm:$0xff]
  %v1043 = vld [vmem:[%s1 + $0x1f0] sm:$0xff]
  %v1044 = vld [vmem:[%s1 + $0x1f8] sm:$0xff]
  %1045 = vmatprep.subr.mxu0 %v1042
  %1046 = vmatpush1.msra.mxu0 %v1041
  %1047 = vmatprep.subr.mxu0 %v1038
  %1048 = vmatpush1.msra.mxu0 %v1037
  %1049 = vmatprep.subr.mxu0 %v1034
  %1050 = vmatpush1.msra.mxu0 %v1033
  %1051 = vmatprep.subr.mxu0 %v1030
  %1052 = vmatpush1.msra.mxu0 %v1029
  %1053 = vmatprep.subr.mxu0 %v1026
  %1054 = vmatpush1.msra.mxu0 %v1025
  %1055 = vmatprep.subr.mxu0 %v1022
  %1056 = vmatpush1.msra.mxu0 %v1021
  %1057 = vmatprep.subr.mxu0 %v1018
  %1058 = vmatpush1.msra.mxu0 %v1017
  %1059 = vmatprep.subr.mxu0 %v1014
  %1060 = vmatpush1.msra.mxu0 %v1013
  %1061 = vmatprep.subr.mxu0 %v1010
  %1062 = vmatpush1.msra.mxu0 %v1009
  %1063 = vmatprep.subr.mxu0 %v1006
  %1064 = vmatpush1.msra.mxu0 %v1005
  %1065 = vmatprep.subr.mxu0 %v1002
  %1066 = vmatpush1.msra.mxu0 %v1001
  %1067 = vmatprep.subr.mxu0 %v998
  %1068 = vmatpush1.msra.mxu0 %v997
  %1069 = vmatprep.subr.mxu0 %v994
  %1070 = vmatpush1.msra.mxu0 %v993
  %1071 = vmatprep.subr.mxu0 %v990
  %1072 = vmatpush1.msra.mxu0 %v989
  %1073 = vmatprep.subr.mxu0 %v986
  %1074 = vmatpush1.msra.mxu0 %v985
  %1075 = vmatprep.subr.mxu0 %v982
  %1076 = vmatpush1.msra.mxu0 %v981
  %1077 = vmatprep.subr.mxu0 0.0
  %1078 = vmatpush2.msra.mxu0 0.0
  %1079 = vmatprep.subr.mxu0 0.0
  %1080 = vmatpush2.msra.mxu0 0.0
  %1081 = vmatprep.subr.mxu0 0.0
  %1082 = vmatpush2.msra.mxu0 0.0
  %1083 = vmatprep.subr.mxu0 0.0
  %1084 = vmatpush2.msra.mxu0 0.0
  %1085 = vmatprep.subr.mxu0 0.0
  %1086 = vmatpush2.msra.mxu0 0.0
  %1087 = vmatprep.subr.mxu0 0.0
  %1088 = vmatpush2.msra.mxu0 0.0
  %1089 = vmatprep.subr.mxu0 0.0
  %1090 = vmatpush2.msra.mxu0 0.0
  %1091 = vmatprep.subr.mxu0 0.0
  %1092 = vmatpush2.msra.mxu0 0.0
  %1093 = vmatprep.subr.mxu0 0.0
  %1094 = vmatpush2.msra.mxu0 0.0
  %1095 = vmatprep.subr.mxu0 0.0
  %1096 = vmatpush2.msra.mxu0 0.0
  %1097 = vmatprep.subr.mxu0 0.0
  %1098 = vmatpush2.msra.mxu0 0.0
  %1099 = vmatprep.subr.mxu0 0.0
  %1100 = vmatpush2.msra.mxu0 0.0
  %1101 = vmatprep.subr.mxu0 0.0
  %1102 = vmatpush2.msra.mxu0 0.0
  %1103 = vmatprep.subr.mxu0 0.0
  %1104 = vmatpush2.msra.mxu0 0.0
  %1105 = vmatprep.subr.mxu0 0.0
  %1106 = vmatpush2.msra.mxu0 0.0
  %1107 = vmatprep.subr.mxu0 0.0
  %1108 = vmatpush2.msra.mxu0 0.0
  %1109 = vmatprep.mubr.f32.mxu0 0.0
  %1110 = vmatmul.mubr.f32.gmra.mxu0 %v973
  %v1111 = vpop.f32.mrf.mxu0
  %v1112 = vadd.f32 0.0, %v1111
  %v1113 = vpop.f32.mrf.mxu0
  %v1114 = vadd.f32 0.0, %v1113
  %1115 = vdwg.mxu0
  %1116 = vmatprep.subr.mxu0 %v1044
  %1117 = vmatpush1.msra.mxu0 %v1043
  %1118 = vmatprep.subr.mxu0 %v1040
  %1119 = vmatpush1.msra.mxu0 %v1039
  %1120 = vmatprep.subr.mxu0 %v1036
  %1121 = vmatpush1.msra.mxu0 %v1035
  %1122 = vmatprep.subr.mxu0 %v1032
  %1123 = vmatpush1.msra.mxu0 %v1031
  %1124 = vmatprep.subr.mxu0 %v1028
  %1125 = vmatpush1.msra.mxu0 %v1027
  %1126 = vmatprep.subr.mxu0 %v1024
  %1127 = vmatpush1.msra.mxu0 %v1023
  %1128 = vmatprep.subr.mxu0 %v1020
  %1129 = vmatpush1.msra.mxu0 %v1019
  %1130 = vmatprep.subr.mxu0 %v1016
  %1131 = vmatpush1.msra.mxu0 %v1015
  %1132 = vmatprep.subr.mxu0 %v1012
  %1133 = vmatpush1.msra.mxu0 %v1011
  %1134 = vmatprep.subr.mxu0 %v1008
  %1135 = vmatpush1.msra.mxu0 %v1007
  %1136 = vmatprep.subr.mxu0 %v1004
  %1137 = vmatpush1.msra.mxu0 %v1003
  %1138 = vmatprep.subr.mxu0 %v1000
  %1139 = vmatpush1.msra.mxu0 %v999
  %1140 = vmatprep.subr.mxu0 %v996
  %1141 = vmatpush1.msra.mxu0 %v995
  %1142 = vmatprep.subr.mxu0 %v992
  %1143 = vmatpush1.msra.mxu0 %v991
  %1144 = vmatprep.subr.mxu0 %v988
  %1145 = vmatpush1.msra.mxu0 %v987
  %1146 = vmatprep.subr.mxu0 %v984
  %1147 = vmatpush1.msra.mxu0 %v983
  %1148 = vmatprep.subr.mxu0 0.0
  %1149 = vmatpush2.msra.mxu0 0.0
  %1150 = vmatprep.subr.mxu0 0.0
  %1151 = vmatpush2.msra.mxu0 0.0
  %1152 = vmatprep.subr.mxu0 0.0
  %1153 = vmatpush2.msra.mxu0 0.0
  %1154 = vmatprep.subr.mxu0 0.0
  %1155 = vmatpush2.msra.mxu0 0.0
  %1156 = vmatprep.subr.mxu0 0.0
  %1157 = vmatpush2.msra.mxu0 0.0
  %1158 = vmatprep.subr.mxu0 0.0
  %1159 = vmatpush2.msra.mxu0 0.0
  %1160 = vmatprep.subr.mxu0 0.0
  %1161 = vmatpush2.msra.mxu0 0.0
  %1162 = vmatprep.subr.mxu0 0.0
  %1163 = vmatpush2.msra.mxu0 0.0
  %1164 = vmatprep.subr.mxu0 0.0
  %1165 = vmatpush2.msra.mxu0 0.0
  %1166 = vmatprep.subr.mxu0 0.0
  %1167 = vmatpush2.msra.mxu0 0.0
  %1168 = vmatprep.subr.mxu0 0.0
  %1169 = vmatpush2.msra.mxu0 0.0
  %1170 = vmatprep.subr.mxu0 0.0
  %1171 = vmatpush2.msra.mxu0 0.0
  %1172 = vmatprep.subr.mxu0 0.0
  %1173 = vmatpush2.msra.mxu0 0.0
  %1174 = vmatprep.subr.mxu0 0.0
  %1175 = vmatpush2.msra.mxu0 0.0
  %1176 = vmatprep.subr.mxu0 0.0
  %1177 = vmatpush2.msra.mxu0 0.0
  %1178 = vmatprep.subr.mxu0 0.0
  %1179 = vmatpush2.msra.mxu0 0.0
  %1180 = vmatprep.mubr.f32.mxu0 0.0
  %1181 = vmatmul.mubr.f32.gmra.mxu0 %v973
  %v1182 = vpop.f32.mrf.mxu0
  %v1183 = vadd.f32 0.0, %v1182
  %v1184 = vpop.f32.mrf.mxu0
  %v1185 = vadd.f32 0.0, %v1184
  %1186 = vdwg.mxu0
  %v1187 = vadd.f32 %v977, %v1112
  %v1188 = vadd.f32 %v978, %v1114
  %v1189 = vadd.f32 %v979, %v1183
  %v1190 = vadd.f32 %v980, %v1185
  %v1191 = vxor.u32 %v1187, 2147483648
  %v1192 = vmul.f32 %v1191, 1.442695
  %v1193 = vpow.pop %v1192
  %v1194 = vadd.f32 %v1193, 1.0
  %v1195 = vrcp.pop %v1194
  %v1196 = vmul.f32 1.0, %v1195
  %v1197 = vxor.u32 %v1188, 2147483648
  %v1198 = vmul.f32 %v1197, 1.442695
  %v1199 = vpow.pop %v1198
  %v1200 = vadd.f32 %v1199, 1.0
  %v1201 = vrcp.pop %v1200
  %v1202 = vmul.f32 1.0, %v1201
  %v1203 = vtanh.pop %v1189
  %v1204 = vxor.u32 %v1190, 2147483648
  %v1205 = vmul.f32 %v1204, 1.442695
  %v1206 = vpow.pop %v1205
  %v1207 = vadd.f32 %v1206, 1.0
  %v1208 = vrcp.pop %v1207
  %v1209 = vmul.f32 1.0, %v1208
  %v1210 = vmul.f32 %v1202, %v971
  %v1211 = vmul.f32 %v1196, %v1203
  %v1212 = vadd.f32 %v1210, %v1211
  %v1213 = vtanh.pop %v1212
  %v1214 = vmul.f32 %v1209, %v1213
  %s1215 = scalar_lea.vmem %s2, 32
  %1216 = vst [vmem:[%s1215] sm:$0xff] %v1214
  %s1217 = scalar_lea.vmem %s0, 160
  %v1218 = vld [vmem:[%s1217] sm:$0xff]
  %v1219 = vld [vmem:[%s1217 + $0x8] sm:$0xff]
  %v1220 = vld [vmem:[%s1217 + $0x10] sm:$0xff]
  %v1221 = vld [vmem:[%s1217 + $0x18] sm:$0xff]
  %v1222 = vld [vmem:[%s1] sm:$0xff]
  %v1223 = vld [vmem:[%s1 + $0x8] sm:$0xff]
  %v1224 = vld [vmem:[%s1 + $0x10] sm:$0xff]
  %v1225 = vld [vmem:[%s1 + $0x18] sm:$0xff]
  %v1226 = vld [vmem:[%s1 + $0x20] sm:$0xff]
  %v1227 = vld [vmem:[%s1 + $0x28] sm:$0xff]
  %v1228 = vld [vmem:[%s1 + $0x30] sm:$0xff]
  %v1229 = vld [vmem:[%s1 + $0x38] sm:$0xff]
  %v1230 = vld [vmem:[%s1 + $0x40] sm:$0xff]
  %v1231 = vld [vmem:[%s1 + $0x48] sm:$0xff]
  %v1232 = vld [vmem:[%s1 + $0x50] sm:$0xff]
  %v1233 = vld [vmem:[%s1 + $0x58] sm:$0xff]
  %v1234 = vld [vmem:[%s1 + $0x60] sm:$0xff]
  %v1235 = vld [vmem:[%s1 + $0x68] sm:$0xff]
  %v1236 = vld [vmem:[%s1 + $0x70] sm:$0xff]
  %v1237 = vld [vmem:[%s1 + $0x78] sm:$0xff]
  %v1238 = vld [vmem:[%s1 + $0x80] sm:$0xff]
  %v1239 = vld [vmem:[%s1 + $0x88] sm:$0xff]
  %v1240 = vld [vmem:[%s1 + $0x90] sm:$0xff]
  %v1241 = vld [vmem:[%s1 + $0x98] sm:$0xff]
  %v1242 = vld [vmem:[%s1 + $0xa0] sm:$0xff]
  %v1243 = vld [vmem:[%s1 + $0xa8] sm:$0xff]
  %v1244 = vld [vmem:[%s1 + $0xb0] sm:$0xff]
  %v1245 = vld [vmem:[%s1 + $0xb8] sm:$0xff]
  %v1246 = vld [vmem:[%s1 + $0xc0] sm:$0xff]
  %v1247 = vld [vmem:[%s1 + $0xc8] sm:$0xff]
  %v1248 = vld [vmem:[%s1 + $0xd0] sm:$0xff]
  %v1249 = vld [vmem:[%s1 + $0xd8] sm:$0xff]
  %v1250 = vld [vmem:[%s1 + $0xe0] sm:$0xff]
  %v1251 = vld [vmem:[%s1 + $0xe8] sm:$0xff]
  %v1252 = vld [vmem:[%s1 + $0xf0] sm:$0xff]
  %v1253 = vld [vmem:[%s1 + $0xf8] sm:$0xff]
  %v1254 = vld [vmem:[%s1 + $0x100] sm:$0xff]
  %v1255 = vld [vmem:[%s1 + $0x108] sm:$0xff]
  %v1256 = vld [vmem:[%s1 + $0x110] sm:$0xff]
  %v1257 = vld [vmem:[%s1 + $0x118] sm:$0xff]
  %v1258 = vld [vmem:[%s1 + $0x120] sm:$0xff]
  %v1259 = vld [vmem:[%s1 + $0x128] sm:$0xff]
  %v1260 = vld [vmem:[%s1 + $0x130] sm:$0xff]
  %v1261 = vld [vmem:[%s1 + $0x138] sm:$0xff]
  %v1262 = vld [vmem:[%s1 + $0x140] sm:$0xff]
  %v1263 = vld [vmem:[%s1 + $0x148] sm:$0xff]
  %v1264 = vld [vmem:[%s1 + $0x150] sm:$0xff]
  %v1265 = vld [vmem:[%s1 + $0x158] sm:$0xff]
  %v1266 = vld [vmem:[%s1 + $0x160] sm:$0xff]
  %v1267 = vld [vmem:[%s1 + $0x168] sm:$0xff]
  %v1268 = vld [vmem:[%s1 + $0x170] sm:$0xff]
  %v1269 = vld [vmem:[%s1 + $0x178] sm:$0xff]
  %v1270 = vld [vmem:[%s1 + $0x180] sm:$0xff]
  %v1271 = vld [vmem:[%s1 + $0x188] sm:$0xff]
  %v1272 = vld [vmem:[%s1 + $0x190] sm:$0xff]
  %v1273 = vld [vmem:[%s1 + $0x198] sm:$0xff]
  %v1274 = vld [vmem:[%s1 + $0x1a0] sm:$0xff]
  %v1275 = vld [vmem:[%s1 + $0x1a8] sm:$0xff]
  %v1276 = vld [vmem:[%s1 + $0x1b0] sm:$0xff]
  %v1277 = vld [vmem:[%s1 + $0x1b8] sm:$0xff]
  %v1278 = vld [vmem:[%s1 + $0x1c0] sm:$0xff]
  %v1279 = vld [vmem:[%s1 + $0x1c8] sm:$0xff]
  %v1280 = vld [vmem:[%s1 + $0x1d0] sm:$0xff]
  %v1281 = vld [vmem:[%s1 + $0x1d8] sm:$0xff]
  %v1282 = vld [vmem:[%s1 + $0x1e0] sm:$0xff]
  %v1283 = vld [vmem:[%s1 + $0x1e8] sm:$0xff]
  %v1284 = vld [vmem:[%s1 + $0x1f0] sm:$0xff]
  %v1285 = vld [vmem:[%s1 + $0x1f8] sm:$0xff]
  %1286 = vmatprep.subr.mxu0 %v1283
  %1287 = vmatpush1.msra.mxu0 %v1282
  %1288 = vmatprep.subr.mxu0 %v1279
  %1289 = vmatpush1.msra.mxu0 %v1278
  %1290 = vmatprep.subr.mxu0 %v1275
  %1291 = vmatpush1.msra.mxu0 %v1274
  %1292 = vmatprep.subr.mxu0 %v1271
  %1293 = vmatpush1.msra.mxu0 %v1270
  %1294 = vmatprep.subr.mxu0 %v1267
  %1295 = vmatpush1.msra.mxu0 %v1266
  %1296 = vmatprep.subr.mxu0 %v1263
  %1297 = vmatpush1.msra.mxu0 %v1262
  %1298 = vmatprep.subr.mxu0 %v1259
  %1299 = vmatpush1.msra.mxu0 %v1258
  %1300 = vmatprep.subr.mxu0 %v1255
  %1301 = vmatpush1.msra.mxu0 %v1254
  %1302 = vmatprep.subr.mxu0 %v1251
  %1303 = vmatpush1.msra.mxu0 %v1250
  %1304 = vmatprep.subr.mxu0 %v1247
  %1305 = vmatpush1.msra.mxu0 %v1246
  %1306 = vmatprep.subr.mxu0 %v1243
  %1307 = vmatpush1.msra.mxu0 %v1242
  %1308 = vmatprep.subr.mxu0 %v1239
  %1309 = vmatpush1.msra.mxu0 %v1238
  %1310 = vmatprep.subr.mxu0 %v1235
  %1311 = vmatpush1.msra.mxu0 %v1234
  %1312 = vmatprep.subr.mxu0 %v1231
  %1313 = vmatpush1.msra.mxu0 %v1230
  %1314 = vmatprep.subr.mxu0 %v1227
  %1315 = vmatpush1.msra.mxu0 %v1226
  %1316 = vmatprep.subr.mxu0 %v1223
  %1317 = vmatpush1.msra.mxu0 %v1222
  %1318 = vmatprep.subr.mxu0 0.0
  %1319 = vmatpush2.msra.mxu0 0.0
  %1320 = vmatprep.subr.mxu0 0.0
  %1321 = vmatpush2.msra.mxu0 0.0
  %1322 = vmatprep.subr.mxu0 0.0
  %1323 = vmatpush2.msra.mxu0 0.0
  %1324 = vmatprep.subr.mxu0 0.0
  %1325 = vmatpush2.msra.mxu0 0.0
  %1326 = vmatprep.subr.mxu0 0.0
  %1327 = vmatpush2.msra.mxu0 0.0
  %1328 = vmatprep.subr.mxu0 0.0
  %1329 = vmatpush2.msra.mxu0 0.0
  %1330 = vmatprep.subr.mxu0 0.0
  %1331 = vmatpush2.msra.mxu0 0.0
  %1332 = vmatprep.subr.mxu0 0.0
  %1333 = vmatpush2.msra.mxu0 0.0
  %1334 = vmatprep.subr.mxu0 0.0
  %1335 = vmatpush2.msra.mxu0 0.0
  %1336 = vmatprep.subr.mxu0 0.0
  %1337 = vmatpush2.msra.mxu0 0.0
  %1338 = vmatprep.subr.mxu0 0.0
  %1339 = vmatpush2.msra.mxu0 0.0
  %1340 = vmatprep.subr.mxu0 0.0
  %1341 = vmatpush2.msra.mxu0 0.0
  %1342 = vmatprep.subr.mxu0 0.0
  %1343 = vmatpush2.msra.mxu0 0.0
  %1344 = vmatprep.subr.mxu0 0.0
  %1345 = vmatpush2.msra.mxu0 0.0
  %1346 = vmatprep.subr.mxu0 0.0
  %1347 = vmatpush2.msra.mxu0 0.0
  %1348 = vmatprep.subr.mxu0 0.0
  %1349 = vmatpush2.msra.mxu0 0.0
  %1350 = vmatprep.mubr.f32.mxu0 0.0
  %1351 = vmatmul.mubr.f32.gmra.mxu0 %v1214
  %v1352 = vpop.f32.mrf.mxu0
  %v1353 = vadd.f32 0.0, %v1352
  %v1354 = vpop.f32.mrf.mxu0
  %v1355 = vadd.f32 0.0, %v1354
  %1356 = vdwg.mxu0
  %1357 = vmatprep.subr.mxu0 %v1285
  %1358 = vmatpush1.msra.mxu0 %v1284
  %1359 = vmatprep.subr.mxu0 %v1281
  %1360 = vmatpush1.msra.mxu0 %v1280
  %1361 = vmatprep.subr.mxu0 %v1277
  %1362 = vmatpush1.msra.mxu0 %v1276
  %1363 = vmatprep.subr.mxu0 %v1273
  %1364 = vmatpush1.msra.mxu0 %v1272
  %1365 = vmatprep.subr.mxu0 %v1269
  %1366 = vmatpush1.msra.mxu0 %v1268
  %1367 = vmatprep.subr.mxu0 %v1265
  %1368 = vmatpush1.msra.mxu0 %v1264
  %1369 = vmatprep.subr.mxu0 %v1261
  %1370 = vmatpush1.msra.mxu0 %v1260
  %1371 = vmatprep.subr.mxu0 %v1257
  %1372 = vmatpush1.msra.mxu0 %v1256
  %1373 = vmatprep.subr.mxu0 %v1253
  %1374 = vmatpush1.msra.mxu0 %v1252
  %1375 = vmatprep.subr.mxu0 %v1249
  %1376 = vmatpush1.msra.mxu0 %v1248
  %1377 = vmatprep.subr.mxu0 %v1245
  %1378 = vmatpush1.msra.mxu0 %v1244
  %1379 = vmatprep.subr.mxu0 %v1241
  %1380 = vmatpush1.msra.mxu0 %v1240
  %1381 = vmatprep.subr.mxu0 %v1237
  %1382 = vmatpush1.msra.mxu0 %v1236
  %1383 = vmatprep.subr.mxu0 %v1233
  %1384 = vmatpush1.msra.mxu0 %v1232
  %1385 = vmatprep.subr.mxu0 %v1229
  %1386 = vmatpush1.msra.mxu0 %v1228
  %1387 = vmatprep.subr.mxu0 %v1225
  %1388 = vmatpush1.msra.mxu0 %v1224
  %1389 = vmatprep.subr.mxu0 0.0
  %1390 = vmatpush2.msra.mxu0 0.0
  %1391 = vmatprep.subr.mxu0 0.0
  %1392 = vmatpush2.msra.mxu0 0.0
  %1393 = vmatprep.subr.mxu0 0.0
  %1394 = vmatpush2.msra.mxu0 0.0
  %1395 = vmatprep.subr.mxu0 0.0
  %1396 = vmatpush2.msra.mxu0 0.0
  %1397 = vmatprep.subr.mxu0 0.0
  %1398 = vmatpush2.msra.mxu0 0.0
  %1399 = vmatprep.subr.mxu0 0.0
  %1400 = vmatpush2.msra.mxu0 0.0
  %1401 = vmatprep.subr.mxu0 0.0
  %1402 = vmatpush2.msra.mxu0 0.0
  %1403 = vmatprep.subr.mxu0 0.0
  %1404 = vmatpush2.msra.mxu0 0.0
  %1405 = vmatprep.subr.mxu0 0.0
  %1406 = vmatpush2.msra.mxu0 0.0
  %1407 = vmatprep.subr.mxu0 0.0
  %1408 = vmatpush2.msra.mxu0 0.0
  %1409 = vmatprep.subr.mxu0 0.0
  %1410 = vmatpush2.msra.mxu0 0.0
  %1411 = vmatprep.subr.mxu0 0.0
  %1412 = vmatpush2.msra.mxu0 0.0
  %1413 = vmatprep.subr.mxu0 0.0
  %1414 = vmatpush2.msra.mxu0 0.0
  %1415 = vmatprep.subr.mxu0 0.0
  %1416 = vmatpush2.msra.mxu0 0.0
  %1417 = vmatprep.subr.mxu0 0.0
  %1418 = vmatpush2.msra.mxu0 0.0
  %1419 = vmatprep.subr.mxu0 0.0
  %1420 = vmatpush2.msra.mxu0 0.0
  %1421 = vmatprep.mubr.f32.mxu0 0.0
  %1422 = vmatmul.mubr.f32.gmra.mxu0 %v1214
  %v1423 = vpop.f32.mrf.mxu0
  %v1424 = vadd.f32 0.0, %v1423
  %v1425 = vpop.f32.mrf.mxu0
  %v1426 = vadd.f32 0.0, %v1425
  %1427 = vdwg.mxu0
  %v1428 = vadd.f32 %v1218, %v1353
  %v1429 = vadd.f32 %v1219, %v1355
  %v1430 = vadd.f32 %v1220, %v1424
  %v1431 = vadd.f32 %v1221, %v1426
  %v1432 = vxor.u32 %v1428, 2147483648
  %v1433 = vmul.f32 %v1432, 1.442695
  %v1434 = vpow.pop %v1433
  %v1435 = vadd.f32 %v1434, 1.0
  %v1436 = vrcp.pop %v1435
  %v1437 = vmul.f32 1.0, %v1436
  %v1438 = vxor.u32 %v1429, 2147483648
  %v1439 = vmul.f32 %v1438, 1.442695
  %v1440 = vpow.pop %v1439
  %v1441 = vadd.f32 %v1440, 1.0
  %v1442 = vrcp.pop %v1441
  %v1443 = vmul.f32 1.0, %v1442
  %v1444 = vtanh.pop %v1430
  %v1445 = vxor.u32 %v1431, 2147483648
  %v1446 = vmul.f32 %v1445, 1.442695
  %v1447 = vpow.pop %v1446
  %v1448 = vadd.f32 %v1447, 1.0
  %v1449 = vrcp.pop %v1448
  %v1450 = vmul.f32 1.0, %v1449
  %v1451 = vmul.f32 %v1443, %v1212
  %v1452 = vmul.f32 %v1437, %v1444
  %v1453 = vadd.f32 %v1451, %v1452
  %v1454 = vtanh.pop %v1453
  %v1455 = vmul.f32 %v1450, %v1454
  %s1456 = scalar_lea.vmem %s2, 40
  %1457 = vst [vmem:[%s1456] sm:$0xff] %v1455
  %s1458 = scalar_lea.vmem %s0, 192
  %v1459 = vld [vmem:[%s1458] sm:$0xff]
  %v1460 = vld [vmem:[%s1458 + $0x8] sm:$0xff]
  %v1461 = vld [vmem:[%s1458 + $0x10] sm:$0xff]
  %v1462 = vld [vmem:[%s1458 + $0x18] sm:$0xff]
  %v1463 = vld [vmem:[%s1] sm:$0xff]
  %v1464 = vld [vmem:[%s1 + $0x8] sm:$0xff]
  %v1465 = vld [vmem:[%s1 + $0x10] sm:$0xff]
  %v1466 = vld [vmem:[%s1 + $0x18] sm:$0xff]
  %v1467 = vld [vmem:[%s1 + $0x20] sm:$0xff]
  %v1468 = vld [vmem:[%s1 + $0x28] sm:$0xff]
  %v1469 = vld [vmem:[%s1 + $0x30] sm:$0xff]
  %v1470 = vld [vmem:[%s1 + $0x38] sm:$0xff]
  %v1471 = vld [vmem:[%s1 + $0x40] sm:$0xff]
  %v1472 = vld [vmem:[%s1 + $0x48] sm:$0xff]
  %v1473 = vld [vmem:[%s1 + $0x50] sm:$0xff]
  %v1474 = vld [vmem:[%s1 + $0x58] sm:$0xff]
  %v1475 = vld [vmem:[%s1 + $0x60] sm:$0xff]
  %v1476 = vld [vmem:[%s1 + $0x68] sm:$0xff]
  %v1477 = vld [vmem:[%s1 + $0x70] sm:$0xff]
  %v1478 = vld [vmem:[%s1 + $0x78] sm:$0xff]
  %v1479 = vld [vmem:[%s1 + $0x80] sm:$0xff]
  %v1480 = vld [vmem:[%s1 + $0x88] sm:$0xff]
  %v1481 = vld [vmem:[%s1 + $0x90] sm:$0xff]
  %v1482 = vld [vmem:[%s1 + $0x98] sm:$0xff]
  %v1483 = vld [vmem:[%s1 + $0xa0] sm:$0xff]
  %v1484 = vld [vmem:[%s1 + $0xa8] sm:$0xff]
  %v1485 = vld [vmem:[%s1 + $0xb0] sm:$0xff]
  %v1486 = vld [vmem:[%s1 + $0xb8] sm:$0xff]
  %v1487 = vld [vmem:[%s1 + $0xc0] sm:$0xff]
  %v1488 = vld [vmem:[%s1 + $0xc8] sm:$0xff]
  %v1489 = vld [vmem:[%s1 + $0xd0] sm:$0xff]
  %v1490 = vld [vmem:[%s1 + $0xd8] sm:$0xff]
  %v1491 = vld [vmem:[%s1 + $0xe0] sm:$0xff]
  %v1492 = vld [vmem:[%s1 + $0xe8] sm:$0xff]
  %v1493 = vld [vmem:[%s1 + $0xf0] sm:$0xff]
  %v1494 = vld [vmem:[%s1 + $0xf8] sm:$0xff]
  %v1495 = vld [vmem:[%s1 + $0x100] sm:$0xff]
  %v1496 = vld [vmem:[%s1 + $0x108] sm:$0xff]
  %v1497 = vld [vmem:[%s1 + $0x110] sm:$0xff]
  %v1498 = vld [vmem:[%s1 + $0x118] sm:$0xff]
  %v1499 = vld [vmem:[%s1 + $0x120] sm:$0xff]
  %v1500 = vld [vmem:[%s1 + $0x128] sm:$0xff]
  %v1501 = vld [vmem:[%s1 + $0x130] sm:$0xff]
  %v1502 = vld [vmem:[%s1 + $0x138] sm:$0xff]
  %v1503 = vld [vmem:[%s1 + $0x140] sm:$0xff]
  %v1504 = vld [vmem:[%s1 + $0x148] sm:$0xff]
  %v1505 = vld [vmem:[%s1 + $0x150] sm:$0xff]
  %v1506 = vld [vmem:[%s1 + $0x158] sm:$0xff]
  %v1507 = vld [vmem:[%s1 + $0x160] sm:$0xff]
  %v1508 = vld [vmem:[%s1 + $0x168] sm:$0xff]
  %v1509 = vld [vmem:[%s1 + $0x170] sm:$0xff]
  %v1510 = vld [vmem:[%s1 + $0x178] sm:$0xff]
  %v1511 = vld [vmem:[%s1 + $0x180] sm:$0xff]
  %v1512 = vld [vmem:[%s1 + $0x188] sm:$0xff]
  %v1513 = vld [vmem:[%s1 + $0x190] sm:$0xff]
  %v1514 = vld [vmem:[%s1 + $0x198] sm:$0xff]
  %v1515 = vld [vmem:[%s1 + $0x1a0] sm:$0xff]
  %v1516 = vld [vmem:[%s1 + $0x1a8] sm:$0xff]
  %v1517 = vld [vmem:[%s1 + $0x1b0] sm:$0xff]
  %v1518 = vld [vmem:[%s1 + $0x1b8] sm:$0xff]
  %v1519 = vld [vmem:[%s1 + $0x1c0] sm:$0xff]
  %v1520 = vld [vmem:[%s1 + $0x1c8] sm:$0xff]
  %v1521 = vld [vmem:[%s1 + $0x1d0] sm:$0xff]
  %v1522 = vld [vmem:[%s1 + $0x1d8] sm:$0xff]
  %v1523 = vld [vmem:[%s1 + $0x1e0] sm:$0xff]
  %v1524 = vld [vmem:[%s1 + $0x1e8] sm:$0xff]
  %v1525 = vld [vmem:[%s1 + $0x1f0] sm:$0xff]
  %v1526 = vld [vmem:[%s1 + $0x1f8] sm:$0xff]
  %1527 = vmatprep.subr.mxu0 %v1524
  %1528 = vmatpush1.msra.mxu0 %v1523
  %1529 = vmatprep.subr.mxu0 %v1520
  %1530 = vmatpush1.msra.mxu0 %v1519
  %1531 = vmatprep.subr.mxu0 %v1516
  %1532 = vmatpush1.msra.mxu0 %v1515
  %1533 = vmatprep.subr.mxu0 %v1512
  %1534 = vmatpush1.msra.mxu0 %v1511
  %1535 = vmatprep.subr.mxu0 %v1508
  %1536 = vmatpush1.msra.mxu0 %v1507
  %1537 = vmatprep.subr.mxu0 %v1504
  %1538 = vmatpush1.msra.mxu0 %v1503
  %1539 = vmatprep.subr.mxu0 %v1500
  %1540 = vmatpush1.msra.mxu0 %v1499
  %1541 = vmatprep.subr.mxu0 %v1496
  %1542 = vmatpush1.msra.mxu0 %v1495
  %1543 = vmatprep.subr.mxu0 %v1492
  %1544 = vmatpush1.msra.mxu0 %v1491
  %1545 = vmatprep.subr.mxu0 %v1488
  %1546 = vmatpush1.msra.mxu0 %v1487
  %1547 = vmatprep.subr.mxu0 %v1484
  %1548 = vmatpush1.msra.mxu0 %v1483
  %1549 = vmatprep.subr.mxu0 %v1480
  %1550 = vmatpush1.msra.mxu0 %v1479
  %1551 = vmatprep.subr.mxu0 %v1476
  %1552 = vmatpush1.msra.mxu0 %v1475
  %1553 = vmatprep.subr.mxu0 %v1472
  %1554 = vmatpush1.msra.mxu0 %v1471
  %1555 = vmatprep.subr.mxu0 %v1468
  %1556 = vmatpush1.msra.mxu0 %v1467
  %1557 = vmatprep.subr.mxu0 %v1464
  %1558 = vmatpush1.msra.mxu0 %v1463
  %1559 = vmatprep.subr.mxu0 0.0
  %1560 = vmatpush2.msra.mxu0 0.0
  %1561 = vmatprep.subr.mxu0 0.0
  %1562 = vmatpush2.msra.mxu0 0.0
  %1563 = vmatprep.subr.mxu0 0.0
  %1564 = vmatpush2.msra.mxu0 0.0
  %1565 = vmatprep.subr.mxu0 0.0
  %1566 = vmatpush2.msra.mxu0 0.0
  %1567 = vmatprep.subr.mxu0 0.0
  %1568 = vmatpush2.msra.mxu0 0.0
  %1569 = vmatprep.subr.mxu0 0.0
  %1570 = vmatpush2.msra.mxu0 0.0
  %1571 = vmatprep.subr.mxu0 0.0
  %1572 = vmatpush2.msra.mxu0 0.0
  %1573 = vmatprep.subr.mxu0 0.0
  %1574 = vmatpush2.msra.mxu0 0.0
  %1575 = vmatprep.subr.mxu0 0.0
  %1576 = vmatpush2.msra.mxu0 0.0
  %1577 = vmatprep.subr.mxu0 0.0
  %1578 = vmatpush2.msra.mxu0 0.0
  %1579 = vmatprep.subr.mxu0 0.0
  %1580 = vmatpush2.msra.mxu0 0.0
  %1581 = vmatprep.subr.mxu0 0.0
  %1582 = vmatpush2.msra.mxu0 0.0
  %1583 = vmatprep.subr.mxu0 0.0
  %1584 = vmatpush2.msra.mxu0 0.0
  %1585 = vmatprep.subr.mxu0 0.0
  %1586 = vmatpush2.msra.mxu0 0.0
  %1587 = vmatprep.subr.mxu0 0.0
  %1588 = vmatpush2.msra.mxu0 0.0
  %1589 = vmatprep.subr.mxu0 0.0
  %1590 = vmatpush2.msra.mxu0 0.0
  %1591 = vmatprep.mubr.f32.mxu0 0.0
  %1592 = vmatmul.mubr.f32.gmra.mxu0 %v1455
  %v1593 = vpop.f32.mrf.mxu0
  %v1594 = vadd.f32 0.0, %v1593
  %v1595 = vpop.f32.mrf.mxu0
  %v1596 = vadd.f32 0.0, %v1595
  %1597 = vdwg.mxu0
  %1598 = vmatprep.subr.mxu0 %v1526
  %1599 = vmatpush1.msra.mxu0 %v1525
  %1600 = vmatprep.subr.mxu0 %v1522
  %1601 = vmatpush1.msra.mxu0 %v1521
  %1602 = vmatprep.subr.mxu0 %v1518
  %1603 = vmatpush1.msra.mxu0 %v1517
  %1604 = vmatprep.subr.mxu0 %v1514
  %1605 = vmatpush1.msra.mxu0 %v1513
  %1606 = vmatprep.subr.mxu0 %v1510
  %1607 = vmatpush1.msra.mxu0 %v1509
  %1608 = vmatprep.subr.mxu0 %v1506
  %1609 = vmatpush1.msra.mxu0 %v1505
  %1610 = vmatprep.subr.mxu0 %v1502
  %1611 = vmatpush1.msra.mxu0 %v1501
  %1612 = vmatprep.subr.mxu0 %v1498
  %1613 = vmatpush1.msra.mxu0 %v1497
  %1614 = vmatprep.subr.mxu0 %v1494
  %1615 = vmatpush1.msra.mxu0 %v1493
  %1616 = vmatprep.subr.mxu0 %v1490
  %1617 = vmatpush1.msra.mxu0 %v1489
  %1618 = vmatprep.subr.mxu0 %v1486
  %1619 = vmatpush1.msra.mxu0 %v1485
  %1620 = vmatprep.subr.mxu0 %v1482
  %1621 = vmatpush1.msra.mxu0 %v1481
  %1622 = vmatprep.subr.mxu0 %v1478
  %1623 = vmatpush1.msra.mxu0 %v1477
  %1624 = vmatprep.subr.mxu0 %v1474
  %1625 = vmatpush1.msra.mxu0 %v1473
  %1626 = vmatprep.subr.mxu0 %v1470
  %1627 = vmatpush1.msra.mxu0 %v1469
  %1628 = vmatprep.subr.mxu0 %v1466
  %1629 = vmatpush1.msra.mxu0 %v1465
  %1630 = vmatprep.subr.mxu0 0.0
  %1631 = vmatpush2.msra.mxu0 0.0
  %1632 = vmatprep.subr.mxu0 0.0
  %1633 = vmatpush2.msra.mxu0 0.0
  %1634 = vmatprep.subr.mxu0 0.0
  %1635 = vmatpush2.msra.mxu0 0.0
  %1636 = vmatprep.subr.mxu0 0.0
  %1637 = vmatpush2.msra.mxu0 0.0
  %1638 = vmatprep.subr.mxu0 0.0
  %1639 = vmatpush2.msra.mxu0 0.0
  %1640 = vmatprep.subr.mxu0 0.0
  %1641 = vmatpush2.msra.mxu0 0.0
  %1642 = vmatprep.subr.mxu0 0.0
  %1643 = vmatpush2.msra.mxu0 0.0
  %1644 = vmatprep.subr.mxu0 0.0
  %1645 = vmatpush2.msra.mxu0 0.0
  %1646 = vmatprep.subr.mxu0 0.0
  %1647 = vmatpush2.msra.mxu0 0.0
  %1648 = vmatprep.subr.mxu0 0.0
  %1649 = vmatpush2.msra.mxu0 0.0
  %1650 = vmatprep.subr.mxu0 0.0
  %1651 = vmatpush2.msra.mxu0 0.0
  %1652 = vmatprep.subr.mxu0 0.0
  %1653 = vmatpush2.msra.mxu0 0.0
  %1654 = vmatprep.subr.mxu0 0.0
  %1655 = vmatpush2.msra.mxu0 0.0
  %1656 = vmatprep.subr.mxu0 0.0
  %1657 = vmatpush2.msra.mxu0 0.0
  %1658 = vmatprep.subr.mxu0 0.0
  %1659 = vmatpush2.msra.mxu0 0.0
  %1660 = vmatprep.subr.mxu0 0.0
  %1661 = vmatpush2.msra.mxu0 0.0
  %1662 = vmatprep.mubr.f32.mxu0 0.0
  %1663 = vmatmul.mubr.f32.gmra.mxu0 %v1455
  %v1664 = vpop.f32.mrf.mxu0
  %v1665 = vadd.f32 0.0, %v1664
  %v1666 = vpop.f32.mrf.mxu0
  %v1667 = vadd.f32 0.0, %v1666
  %1668 = vdwg.mxu0
  %v1669 = vadd.f32 %v1459, %v1594
  %v1670 = vadd.f32 %v1460, %v1596
  %v1671 = vadd.f32 %v1461, %v1665
  %v1672 = vadd.f32 %v1462, %v1667
  %v1673 = vxor.u32 %v1669, 2147483648
  %v1674 = vmul.f32 %v1673, 1.442695
  %v1675 = vpow.pop %v1674
  %v1676 = vadd.f32 %v1675, 1.0
  %v1677 = vrcp.pop %v1676
  %v1678 = vmul.f32 1.0, %v1677
  %v1679 = vxor.u32 %v1670, 2147483648
  %v1680 = vmul.f32 %v1679, 1.442695
  %v1681 = vpow.pop %v1680
  %v1682 = vadd.f32 %v1681, 1.0
  %v1683 = vrcp.pop %v1682
  %v1684 = vmul.f32 1.0, %v1683
  %v1685 = vtanh.pop %v1671
  %v1686 = vxor.u32 %v1672, 2147483648
  %v1687 = vmul.f32 %v1686, 1.442695
  %v1688 = vpow.pop %v1687
  %v1689 = vadd.f32 %v1688, 1.0
  %v1690 = vrcp.pop %v1689
  %v1691 = vmul.f32 1.0, %v1690
  %v1692 = vmul.f32 %v1684, %v1453
  %v1693 = vmul.f32 %v1678, %v1685
  %v1694 = vadd.f32 %v1692, %v1693
  %v1695 = vtanh.pop %v1694
  %v1696 = vmul.f32 %v1691, %v1695
  %s1697 = scalar_lea.vmem %s2, 48
  %1698 = vst [vmem:[%s1697] sm:$0xff] %v1696
  %s1699 = scalar_lea.vmem %s0, 224
  %v1700 = vld [vmem:[%s1699] sm:$0xff]
  %v1701 = vld [vmem:[%s1699 + $0x8] sm:$0xff]
  %v1702 = vld [vmem:[%s1699 + $0x10] sm:$0xff]
  %v1703 = vld [vmem:[%s1699 + $0x18] sm:$0xff]
  %v1704 = vld [vmem:[%s1] sm:$0xff]
  %v1705 = vld [vmem:[%s1 + $0x8] sm:$0xff]
  %v1706 = vld [vmem:[%s1 + $0x10] sm:$0xff]
  %v1707 = vld [vmem:[%s1 + $0x18] sm:$0xff]
  %v1708 = vld [vmem:[%s1 + $0x20] sm:$0xff]
  %v1709 = vld [vmem:[%s1 + $0x28] sm:$0xff]
  %v1710 = vld [vmem:[%s1 + $0x30] sm:$0xff]
  %v1711 = vld [vmem:[%s1 + $0x38] sm:$0xff]
  %v1712 = vld [vmem:[%s1 + $0x40] sm:$0xff]
  %v1713 = vld [vmem:[%s1 + $0x48] sm:$0xff]
  %v1714 = vld [vmem:[%s1 + $0x50] sm:$0xff]
  %v1715 = vld [vmem:[%s1 + $0x58] sm:$0xff]
  %v1716 = vld [vmem:[%s1 + $0x60] sm:$0xff]
  %v1717 = vld [vmem:[%s1 + $0x68] sm:$0xff]
  %v1718 = vld [vmem:[%s1 + $0x70] sm:$0xff]
  %v1719 = vld [vmem:[%s1 + $0x78] sm:$0xff]
  %v1720 = vld [vmem:[%s1 + $0x80] sm:$0xff]
  %v1721 = vld [vmem:[%s1 + $0x88] sm:$0xff]
  %v1722 = vld [vmem:[%s1 + $0x90] sm:$0xff]
  %v1723 = vld [vmem:[%s1 + $0x98] sm:$0xff]
  %v1724 = vld [vmem:[%s1 + $0xa0] sm:$0xff]
  %v1725 = vld [vmem:[%s1 + $0xa8] sm:$0xff]
  %v1726 = vld [vmem:[%s1 + $0xb0] sm:$0xff]
  %v1727 = vld [vmem:[%s1 + $0xb8] sm:$0xff]
  %v1728 = vld [vmem:[%s1 + $0xc0] sm:$0xff]
  %v1729 = vld [vmem:[%s1 + $0xc8] sm:$0xff]
  %v1730 = vld [vmem:[%s1 + $0xd0] sm:$0xff]
  %v1731 = vld [vmem:[%s1 + $0xd8] sm:$0xff]
  %v1732 = vld [vmem:[%s1 + $0xe0] sm:$0xff]
  %v1733 = vld [vmem:[%s1 + $0xe8] sm:$0xff]
  %v1734 = vld [vmem:[%s1 + $0xf0] sm:$0xff]
  %v1735 = vld [vmem:[%s1 + $0xf8] sm:$0xff]
  %v1736 = vld [vmem:[%s1 + $0x100] sm:$0xff]
  %v1737 = vld [vmem:[%s1 + $0x108] sm:$0xff]
  %v1738 = vld [vmem:[%s1 + $0x110] sm:$0xff]
  %v1739 = vld [vmem:[%s1 + $0x118] sm:$0xff]
  %v1740 = vld [vmem:[%s1 + $0x120] sm:$0xff]
  %v1741 = vld [vmem:[%s1 + $0x128] sm:$0xff]
  %v1742 = vld [vmem:[%s1 + $0x130] sm:$0xff]
  %v1743 = vld [vmem:[%s1 + $0x138] sm:$0xff]
  %v1744 = vld [vmem:[%s1 + $0x140] sm:$0xff]
  %v1745 = vld [vmem:[%s1 + $0x148] sm:$0xff]
  %v1746 = vld [vmem:[%s1 + $0x150] sm:$0xff]
  %v1747 = vld [vmem:[%s1 + $0x158] sm:$0xff]
  %v1748 = vld [vmem:[%s1 + $0x160] sm:$0xff]
  %v1749 = vld [vmem:[%s1 + $0x168] sm:$0xff]
  %v1750 = vld [vmem:[%s1 + $0x170] sm:$0xff]
  %v1751 = vld [vmem:[%s1 + $0x178] sm:$0xff]
  %v1752 = vld [vmem:[%s1 + $0x180] sm:$0xff]
  %v1753 = vld [vmem:[%s1 + $0x188] sm:$0xff]
  %v1754 = vld [vmem:[%s1 + $0x190] sm:$0xff]
  %v1755 = vld [vmem:[%s1 + $0x198] sm:$0xff]
  %v1756 = vld [vmem:[%s1 + $0x1a0] sm:$0xff]
  %v1757 = vld [vmem:[%s1 + $0x1a8] sm:$0xff]
  %v1758 = vld [vmem:[%s1 + $0x1b0] sm:$0xff]
  %v1759 = vld [vmem:[%s1 + $0x1b8] sm:$0xff]
  %v1760 = vld [vmem:[%s1 + $0x1c0] sm:$0xff]
  %v1761 = vld [vmem:[%s1 + $0x1c8] sm:$0xff]
  %v1762 = vld [vmem:[%s1 + $0x1d0] sm:$0xff]
  %v1763 = vld [vmem:[%s1 + $0x1d8] sm:$0xff]
  %v1764 = vld [vmem:[%s1 + $0x1e0] sm:$0xff]
  %v1765 = vld [vmem:[%s1 + $0x1e8] sm:$0xff]
  %v1766 = vld [vmem:[%s1 + $0x1f0] sm:$0xff]
  %v1767 = vld [vmem:[%s1 + $0x1f8] sm:$0xff]
  %1768 = vmatprep.subr.mxu0 %v1765
  %1769 = vmatpush1.msra.mxu0 %v1764
  %1770 = vmatprep.subr.mxu0 %v1761
  %1771 = vmatpush1.msra.mxu0 %v1760
  %1772 = vmatprep.subr.mxu0 %v1757
  %1773 = vmatpush1.msra.mxu0 %v1756
  %1774 = vmatprep.subr.mxu0 %v1753
  %1775 = vmatpush1.msra.mxu0 %v1752
  %1776 = vmatprep.subr.mxu0 %v1749
  %1777 = vmatpush1.msra.mxu0 %v1748
  %1778 = vmatprep.subr.mxu0 %v1745
  %1779 = vmatpush1.msra.mxu0 %v1744
  %1780 = vmatprep.subr.mxu0 %v1741
  %1781 = vmatpush1.msra.mxu0 %v1740
  %1782 = vmatprep.subr.mxu0 %v1737
  %1783 = vmatpush1.msra.mxu0 %v1736
  %1784 = vmatprep.subr.mxu0 %v1733
  %1785 = vmatpush1.msra.mxu0 %v1732
  %1786 = vmatprep.subr.mxu0 %v1729
  %1787 = vmatpush1.msra.mxu0 %v1728
  %1788 = vmatprep.subr.mxu0 %v1725
  %1789 = vmatpush1.msra.mxu0 %v1724
  %1790 = vmatprep.subr.mxu0 %v1721
  %1791 = vmatpush1.msra.mxu0 %v1720
  %1792 = vmatprep.subr.mxu0 %v1717
  %1793 = vmatpush1.msra.mxu0 %v1716
  %1794 = vmatprep.subr.mxu0 %v1713
  %1795 = vmatpush1.msra.mxu0 %v1712
  %1796 = vmatprep.subr.mxu0 %v1709
  %1797 = vmatpush1.msra.mxu0 %v1708
  %1798 = vmatprep.subr.mxu0 %v1705
  %1799 = vmatpush1.msra.mxu0 %v1704
  %1800 = vmatprep.subr.mxu0 0.0
  %1801 = vmatpush2.msra.mxu0 0.0
  %1802 = vmatprep.subr.mxu0 0.0
  %1803 = vmatpush2.msra.mxu0 0.0
  %1804 = vmatprep.subr.mxu0 0.0
  %1805 = vmatpush2.msra.mxu0 0.0
  %1806 = vmatprep.subr.mxu0 0.0
  %1807 = vmatpush2.msra.mxu0 0.0
  %1808 = vmatprep.subr.mxu0 0.0
  %1809 = vmatpush2.msra.mxu0 0.0
  %1810 = vmatprep.subr.mxu0 0.0
  %1811 = vmatpush2.msra.mxu0 0.0
  %1812 = vmatprep.subr.mxu0 0.0
  %1813 = vmatpush2.msra.mxu0 0.0
  %1814 = vmatprep.subr.mxu0 0.0
  %1815 = vmatpush2.msra.mxu0 0.0
  %1816 = vmatprep.subr.mxu0 0.0
  %1817 = vmatpush2.msra.mxu0 0.0
  %1818 = vmatprep.subr.mxu0 0.0
  %1819 = vmatpush2.msra.mxu0 0.0
  %1820 = vmatprep.subr.mxu0 0.0
  %1821 = vmatpush2.msra.mxu0 0.0
  %1822 = vmatprep.subr.mxu0 0.0
  %1823 = vmatpush2.msra.mxu0 0.0
  %1824 = vmatprep.subr.mxu0 0.0
  %1825 = vmatpush2.msra.mxu0 0.0
  %1826 = vmatprep.subr.mxu0 0.0
  %1827 = vmatpush2.msra.mxu0 0.0
  %1828 = vmatprep.subr.mxu0 0.0
  %1829 = vmatpush2.msra.mxu0 0.0
  %1830 = vmatprep.subr.mxu0 0.0
  %1831 = vmatpush2.msra.mxu0 0.0
  %1832 = vmatprep.mubr.f32.mxu0 0.0
  %1833 = vmatmul.mubr.f32.gmra.mxu0 %v1696
  %v1834 = vpop.f32.mrf.mxu0
  %v1835 = vadd.f32 0.0, %v1834
  %v1836 = vpop.f32.mrf.mxu0
  %v1837 = vadd.f32 0.0, %v1836
  %1838 = vdwg.mxu0
  %1839 = vmatprep.subr.mxu0 %v1767
  %1840 = vmatpush1.msra.mxu0 %v1766
  %1841 = vmatprep.subr.mxu0 %v1763
  %1842 = vmatpush1.msra.mxu0 %v1762
  %1843 = vmatprep.subr.mxu0 %v1759
  %1844 = vmatpush1.msra.mxu0 %v1758
  %1845 = vmatprep.subr.mxu0 %v1755
  %1846 = vmatpush1.msra.mxu0 %v1754
  %1847 = vmatprep.subr.mxu0 %v1751
  %1848 = vmatpush1.msra.mxu0 %v1750
  %1849 = vmatprep.subr.mxu0 %v1747
  %1850 = vmatpush1.msra.mxu0 %v1746
  %1851 = vmatprep.subr.mxu0 %v1743
  %1852 = vmatpush1.msra.mxu0 %v1742
  %1853 = vmatprep.subr.mxu0 %v1739
  %1854 = vmatpush1.msra.mxu0 %v1738
  %1855 = vmatprep.subr.mxu0 %v1735
  %1856 = vmatpush1.msra.mxu0 %v1734
  %1857 = vmatprep.subr.mxu0 %v1731
  %1858 = vmatpush1.msra.mxu0 %v1730
  %1859 = vmatprep.subr.mxu0 %v1727
  %1860 = vmatpush1.msra.mxu0 %v1726
  %1861 = vmatprep.subr.mxu0 %v1723
  %1862 = vmatpush1.msra.mxu0 %v1722
  %1863 = vmatprep.subr.mxu0 %v1719
  %1864 = vmatpush1.msra.mxu0 %v1718
  %1865 = vmatprep.subr.mxu0 %v1715
  %1866 = vmatpush1.msra.mxu0 %v1714
  %1867 = vmatprep.subr.mxu0 %v1711
  %1868 = vmatpush1.msra.mxu0 %v1710
  %1869 = vmatprep.subr.mxu0 %v1707
  %1870 = vmatpush1.msra.mxu0 %v1706
  %1871 = vmatprep.subr.mxu0 0.0
  %1872 = vmatpush2.msra.mxu0 0.0
  %1873 = vmatprep.subr.mxu0 0.0
  %1874 = vmatpush2.msra.mxu0 0.0
  %1875 = vmatprep.subr.mxu0 0.0
  %1876 = vmatpush2.msra.mxu0 0.0
  %1877 = vmatprep.subr.mxu0 0.0
  %1878 = vmatpush2.msra.mxu0 0.0
  %1879 = vmatprep.subr.mxu0 0.0
  %1880 = vmatpush2.msra.mxu0 0.0
  %1881 = vmatprep.subr.mxu0 0.0
  %1882 = vmatpush2.msra.mxu0 0.0
  %1883 = vmatprep.subr.mxu0 0.0
  %1884 = vmatpush2.msra.mxu0 0.0
  %1885 = vmatprep.subr.mxu0 0.0
  %1886 = vmatpush2.msra.mxu0 0.0
  %1887 = vmatprep.subr.mxu0 0.0
  %1888 = vmatpush2.msra.mxu0 0.0
  %1889 = vmatprep.subr.mxu0 0.0
  %1890 = vmatpush2.msra.mxu0 0.0
  %1891 = vmatprep.subr.mxu0 0.0
  %1892 = vmatpush2.msra.mxu0 0.0
  %1893 = vmatprep.subr.mxu0 0.0
  %1894 = vmatpush2.msra.mxu0 0.0
  %1895 = vmatprep.subr.mxu0 0.0
  %1896 = vmatpush2.msra.mxu0 0.0
  %1897 = vmatprep.subr.mxu0 0.0
  %1898 = vmatpush2.msra.mxu0 0.0
  %1899 = vmatprep.subr.mxu0 0.0
  %1900 = vmatpush2.msra.mxu0 0.0
  %1901 = vmatprep.subr.mxu0 0.0
  %1902 = vmatpush2.msra.mxu0 0.0
  %1903 = vmatprep.mubr.f32.mxu0 0.0
  %1904 = vmatmul.mubr.f32.gmra.mxu0 %v1696
  %v1905 = vpop.f32.mrf.mxu0
  %v1906 = vadd.f32 0.0, %v1905
  %v1907 = vpop.f32.mrf.mxu0
  %v1908 = vadd.f32 0.0, %v1907
  %1909 = vdwg.mxu0
  %v1910 = vadd.f32 %v1700, %v1835
  %v1911 = vadd.f32 %v1701, %v1837
  %v1912 = vadd.f32 %v1702, %v1906
  %v1913 = vadd.f32 %v1703, %v1908
  %v1914 = vxor.u32 %v1910, 2147483648
  %v1915 = vmul.f32 %v1914, 1.442695
  %v1916 = vpow.pop %v1915
  %v1917 = vadd.f32 %v1916, 1.0
  %v1918 = vrcp.pop %v1917
  %v1919 = vmul.f32 1.0, %v1918
  %v1920 = vxor.u32 %v1911, 2147483648
  %v1921 = vmul.f32 %v1920, 1.442695
  %v1922 = vpow.pop %v1921
  %v1923 = vadd.f32 %v1922, 1.0
  %v1924 = vrcp.pop %v1923
  %v1925 = vmul.f32 1.0, %v1924
  %v1926 = vtanh.pop %v1912
  %v1927 = vxor.u32 %v1913, 2147483648
  %v1928 = vmul.f32 %v1927, 1.442695
  %v1929 = vpow.pop %v1928
  %v1930 = vadd.f32 %v1929, 1.0
  %v1931 = vrcp.pop %v1930
  %v1932 = vmul.f32 1.0, %v1931
  %v1933 = vmul.f32 %v1925, %v1694
  %v1934 = vmul.f32 %v1919, %v1926
  %v1935 = vadd.f32 %v1933, %v1934
  %v1936 = vtanh.pop %v1935
  %v1937 = vmul.f32 %v1932, %v1936
  %s1938 = scalar_lea.vmem %s2, 56
  %1939 = vst [vmem:[%s1938] sm:$0xff] %v1937
  %s1940 = scalar_lea.vmem %s0, 256
  %v1941 = vld [vmem:[%s1940] sm:$0xff]
  %v1942 = vld [vmem:[%s1940 + $0x8] sm:$0xff]
  %v1943 = vld [vmem:[%s1940 + $0x10] sm:$0xff]
  %v1944 = vld [vmem:[%s1940 + $0x18] sm:$0xff]
  %v1945 = vld [vmem:[%s1] sm:$0xff]
  %v1946 = vld [vmem:[%s1 + $0x8] sm:$0xff]
  %v1947 = vld [vmem:[%s1 + $0x10] sm:$0xff]
  %v1948 = vld [vmem:[%s1 + $0x18] sm:$0xff]
  %v1949 = vld [vmem:[%s1 + $0x20] sm:$0xff]
  %v1950 = vld [vmem:[%s1 + $0x28] sm:$0xff]
  %v1951 = vld [vmem:[%s1 + $0x30] sm:$0xff]
  %v1952 = vld [vmem:[%s1 + $0x38] sm:$0xff]
  %v1953 = vld [vmem:[%s1 + $0x40] sm:$0xff]
  %v1954 = vld [vmem:[%s1 + $0x48] sm:$0xff]
  %v1955 = vld [vmem:[%s1 + $0x50] sm:$0xff]
  %v1956 = vld [vmem:[%s1 + $0x58] sm:$0xff]
  %v1957 = vld [vmem:[%s1 + $0x60] sm:$0xff]
  %v1958 = vld [vmem:[%s1 + $0x68] sm:$0xff]
  %v1959 = vld [vmem:[%s1 + $0x70] sm:$0xff]
  %v1960 = vld [vmem:[%s1 + $0x78] sm:$0xff]
  %v1961 = vld [vmem:[%s1 + $0x80] sm:$0xff]
  %v1962 = vld [vmem:[%s1 + $0x88] sm:$0xff]
  %v1963 = vld [vmem:[%s1 + $0x90] sm:$0xff]
  %v1964 = vld [vmem:[%s1 + $0x98] sm:$0xff]
  %v1965 = vld [vmem:[%s1 + $0xa0] sm:$0xff]
  %v1966 = vld [vmem:[%s1 + $0xa8] sm:$0xff]
  %v1967 = vld [vmem:[%s1 + $0xb0] sm:$0xff]
  %v1968 = vld [vmem:[%s1 + $0xb8] sm:$0xff]
  %v1969 = vld [vmem:[%s1 + $0xc0] sm:$0xff]
  %v1970 = vld [vmem:[%s1 + $0xc8] sm:$0xff]
  %v1971 = vld [vmem:[%s1 + $0xd0] sm:$0xff]
  %v1972 = vld [vmem:[%s1 + $0xd8] sm:$0xff]
  %v1973 = vld [vmem:[%s1 + $0xe0] sm:$0xff]
  %v1974 = vld [vmem:[%s1 + $0xe8] sm:$0xff]
  %v1975 = vld [vmem:[%s1 + $0xf0] sm:$0xff]
  %v1976 = vld [vmem:[%s1 + $0xf8] sm:$0xff]
  %v1977 = vld [vmem:[%s1 + $0x100] sm:$0xff]
  %v1978 = vld [vmem:[%s1 + $0x108] sm:$0xff]
  %v1979 = vld [vmem:[%s1 + $0x110] sm:$0xff]
  %v1980 = vld [vmem:[%s1 + $0x118] sm:$0xff]
  %v1981 = vld [vmem:[%s1 + $0x120] sm:$0xff]
  %v1982 = vld [vmem:[%s1 + $0x128] sm:$0xff]
  %v1983 = vld [vmem:[%s1 + $0x130] sm:$0xff]
  %v1984 = vld [vmem:[%s1 + $0x138] sm:$0xff]
  %v1985 = vld [vmem:[%s1 + $0x140] sm:$0xff]
  %v1986 = vld [vmem:[%s1 + $0x148] sm:$0xff]
  %v1987 = vld [vmem:[%s1 + $0x150] sm:$0xff]
  %v1988 = vld [vmem:[%s1 + $0x158] sm:$0xff]
  %v1989 = vld [vmem:[%s1 + $0x160] sm:$0xff]
  %v1990 = vld [vmem:[%s1 + $0x168] sm:$0xff]
  %v1991 = vld [vmem:[%s1 + $0x170] sm:$0xff]
  %v1992 = vld [vmem:[%s1 + $0x178] sm:$0xff]
  %v1993 = vld [vmem:[%s1 + $0x180] sm:$0xff]
  %v1994 = vld [vmem:[%s1 + $0x188] sm:$0xff]
  %v1995 = vld [vmem:[%s1 + $0x190] sm:$0xff]
  %v1996 = vld [vmem:[%s1 + $0x198] sm:$0xff]
  %v1997 = vld [vmem:[%s1 + $0x1a0] sm:$0xff]
  %v1998 = vld [vmem:[%s1 + $0x1a8] sm:$0xff]
  %v1999 = vld [vmem:[%s1 + $0x1b0] sm:$0xff]
  %v2000 = vld [vmem:[%s1 + $0x1b8] sm:$0xff]
  %v2001 = vld [vmem:[%s1 + $0x1c0] sm:$0xff]
  %v2002 = vld [vmem:[%s1 + $0x1c8] sm:$0xff]
  %v2003 = vld [vmem:[%s1 + $0x1d0] sm:$0xff]
  %v2004 = vld [vmem:[%s1 + $0x1d8] sm:$0xff]
  %v2005 = vld [vmem:[%s1 + $0x1e0] sm:$0xff]
  %v2006 = vld [vmem:[%s1 + $0x1e8] sm:$0xff]
  %v2007 = vld [vmem:[%s1 + $0x1f0] sm:$0xff]
  %v2008 = vld [vmem:[%s1 + $0x1f8] sm:$0xff]
  %2009 = vmatprep.subr.mxu0 %v2006
  %2010 = vmatpush1.msra.mxu0 %v2005
  %2011 = vmatprep.subr.mxu0 %v2002
  %2012 = vmatpush1.msra.mxu0 %v2001
  %2013 = vmatprep.subr.mxu0 %v1998
  %2014 = vmatpush1.msra.mxu0 %v1997
  %2015 = vmatprep.subr.mxu0 %v1994
  %2016 = vmatpush1.msra.mxu0 %v1993
  %2017 = vmatprep.subr.mxu0 %v1990
  %2018 = vmatpush1.msra.mxu0 %v1989
  %2019 = vmatprep.subr.mxu0 %v1986
  %2020 = vmatpush1.msra.mxu0 %v1985
  %2021 = vmatprep.subr.mxu0 %v1982
  %2022 = vmatpush1.msra.mxu0 %v1981
  %2023 = vmatprep.subr.mxu0 %v1978
  %2024 = vmatpush1.msra.mxu0 %v1977
  %2025 = vmatprep.subr.mxu0 %v1974
  %2026 = vmatpush1.msra.mxu0 %v1973
  %2027 = vmatprep.subr.mxu0 %v1970
  %2028 = vmatpush1.msra.mxu0 %v1969
  %2029 = vmatprep.subr.mxu0 %v1966
  %2030 = vmatpush1.msra.mxu0 %v1965
  %2031 = vmatprep.subr.mxu0 %v1962
  %2032 = vmatpush1.msra.mxu0 %v1961
  %2033 = vmatprep.subr.mxu0 %v1958
  %2034 = vmatpush1.msra.mxu0 %v1957
  %2035 = vmatprep.subr.mxu0 %v1954
  %2036 = vmatpush1.msra.mxu0 %v1953
  %2037 = vmatprep.subr.mxu0 %v1950
  %2038 = vmatpush1.msra.mxu0 %v1949
  %2039 = vmatprep.subr.mxu0 %v1946
  %2040 = vmatpush1.msra.mxu0 %v1945
  %2041 = vmatprep.subr.mxu0 0.0
  %2042 = vmatpush2.msra.mxu0 0.0
  %2043 = vmatprep.subr.mxu0 0.0
  %2044 = vmatpush2.msra.mxu0 0.0
  %2045 = vmatprep.subr.mxu0 0.0
  %2046 = vmatpush2.msra.mxu0 0.0
  %2047 = vmatprep.subr.mxu0 0.0
  %2048 = vmatpush2.msra.mxu0 0.0
  %2049 = vmatprep.subr.mxu0 0.0
  %2050 = vmatpush2.msra.mxu0 0.0
  %2051 = vmatprep.subr.mxu0 0.0
  %2052 = vmatpush2.msra.mxu0 0.0
  %2053 = vmatprep.subr.mxu0 0.0
  %2054 = vmatpush2.msra.mxu0 0.0
  %2055 = vmatprep.subr.mxu0 0.0
  %2056 = vmatpush2.msra.mxu0 0.0
  %2057 = vmatprep.subr.mxu0 0.0
  %2058 = vmatpush2.msra.mxu0 0.0
  %2059 = vmatprep.subr.mxu0 0.0
  %2060 = vmatpush2.msra.mxu0 0.0
  %2061 = vmatprep.subr.mxu0 0.0
  %2062 = vmatpush2.msra.mxu0 0.0
  %2063 = vmatprep.subr.mxu0 0.0
  %2064 = vmatpush2.msra.mxu0 0.0
  %2065 = vmatprep.subr.mxu0 0.0
  %2066 = vmatpush2.msra.mxu0 0.0
  %2067 = vmatprep.subr.mxu0 0.0
  %2068 = vmatpush2.msra.mxu0 0.0
  %2069 = vmatprep.subr.mxu0 0.0
  %2070 = vmatpush2.msra.mxu0 0.0
  %2071 = vmatprep.subr.mxu0 0.0
  %2072 = vmatpush2.msra.mxu0 0.0
  %2073 = vmatprep.mubr.f32.mxu0 0.0
  %2074 = vmatmul.mubr.f32.gmra.mxu0 %v1937
  %v2075 = vpop.f32.mrf.mxu0
  %v2076 = vadd.f32 0.0, %v2075
  %v2077 = vpop.f32.mrf.mxu0
  %v2078 = vadd.f32 0.0, %v2077
  %2079 = vdwg.mxu0
  %2080 = vmatprep.subr.mxu0 %v2008
  %2081 = vmatpush1.msra.mxu0 %v2007
  %2082 = vmatprep.subr.mxu0 %v2004
  %2083 = vmatpush1.msra.mxu0 %v2003
  %2084 = vmatprep.subr.mxu0 %v2000
  %2085 = vmatpush1.msra.mxu0 %v1999
  %2086 = vmatprep.subr.mxu0 %v1996
  %2087 = vmatpush1.msra.mxu0 %v1995
  %2088 = vmatprep.subr.mxu0 %v1992
  %2089 = vmatpush1.msra.mxu0 %v1991
  %2090 = vmatprep.subr.mxu0 %v1988
  %2091 = vmatpush1.msra.mxu0 %v1987
  %2092 = vmatprep.subr.mxu0 %v1984
  %2093 = vmatpush1.msra.mxu0 %v1983
  %2094 = vmatprep.subr.mxu0 %v1980
  %2095 = vmatpush1.msra.mxu0 %v1979
  %2096 = vmatprep.subr.mxu0 %v1976
  %2097 = vmatpush1.msra.mxu0 %v1975
  %2098 = vmatprep.subr.mxu0 %v1972
  %2099 = vmatpush1.msra.mxu0 %v1971
  %2100 = vmatprep.subr.mxu0 %v1968
  %2101 = vmatpush1.msra.mxu0 %v1967
  %2102 = vmatprep.subr.mxu0 %v1964
  %2103 = vmatpush1.msra.mxu0 %v1963
  %2104 = vmatprep.subr.mxu0 %v1960
  %2105 = vmatpush1.msra.mxu0 %v1959
  %2106 = vmatprep.subr.mxu0 %v1956
  %2107 = vmatpush1.msra.mxu0 %v1955
  %2108 = vmatprep.subr.mxu0 %v1952
  %2109 = vmatpush1.msra.mxu0 %v1951
  %2110 = vmatprep.subr.mxu0 %v1948
  %2111 = vmatpush1.msra.mxu0 %v1947
  %2112 = vmatprep.subr.mxu0 0.0
  %2113 = vmatpush2.msra.mxu0 0.0
  %2114 = vmatprep.subr.mxu0 0.0
  %2115 = vmatpush2.msra.mxu0 0.0
  %2116 = vmatprep.subr.mxu0 0.0
  %2117 = vmatpush2.msra.mxu0 0.0
  %2118 = vmatprep.subr.mxu0 0.0
  %2119 = vmatpush2.msra.mxu0 0.0
  %2120 = vmatprep.subr.mxu0 0.0
  %2121 = vmatpush2.msra.mxu0 0.0
  %2122 = vmatprep.subr.mxu0 0.0
  %2123 = vmatpush2.msra.mxu0 0.0
  %2124 = vmatprep.subr.mxu0 0.0
  %2125 = vmatpush2.msra.mxu0 0.0
  %2126 = vmatprep.subr.mxu0 0.0
  %2127 = vmatpush2.msra.mxu0 0.0
  %2128 = vmatprep.subr.mxu0 0.0
  %2129 = vmatpush2.msra.mxu0 0.0
  %2130 = vmatprep.subr.mxu0 0.0
  %2131 = vmatpush2.msra.mxu0 0.0
  %2132 = vmatprep.subr.mxu0 0.0
  %2133 = vmatpush2.msra.mxu0 0.0
  %2134 = vmatprep.subr.mxu0 0.0
  %2135 = vmatpush2.msra.mxu0 0.0
  %2136 = vmatprep.subr.mxu0 0.0
  %2137 = vmatpush2.msra.mxu0 0.0
  %2138 = vmatprep.subr.mxu0 0.0
  %2139 = vmatpush2.msra.mxu0 0.0
  %2140 = vmatprep.subr.mxu0 0.0
  %2141 = vmatpush2.msra.mxu0 0.0
  %2142 = vmatprep.subr.mxu0 0.0
  %2143 = vmatpush2.msra.mxu0 0.0
  %2144 = vmatprep.mubr.f32.mxu0 0.0
  %2145 = vmatmul.mubr.f32.gmra.mxu0 %v1937
  %v2146 = vpop.f32.mrf.mxu0
  %v2147 = vadd.f32 0.0, %v2146
  %v2148 = vpop.f32.mrf.mxu0
  %v2149 = vadd.f32 0.0, %v2148
  %2150 = vdwg.mxu0
  %v2151 = vadd.f32 %v1941, %v2076
  %v2152 = vadd.f32 %v1942, %v2078
  %v2153 = vadd.f32 %v1943, %v2147
  %v2154 = vadd.f32 %v1944, %v2149
  %v2155 = vxor.u32 %v2151, 2147483648
  %v2156 = vmul.f32 %v2155, 1.442695
  %v2157 = vpow.pop %v2156
  %v2158 = vadd.f32 %v2157, 1.0
  %v2159 = vrcp.pop %v2158
  %v2160 = vmul.f32 1.0, %v2159
  %v2161 = vxor.u32 %v2152, 2147483648
  %v2162 = vmul.f32 %v2161, 1.442695
  %v2163 = vpow.pop %v2162
  %v2164 = vadd.f32 %v2163, 1.0
  %v2165 = vrcp.pop %v2164
  %v2166 = vmul.f32 1.0, %v2165
  %v2167 = vtanh.pop %v2153
  %v2168 = vxor.u32 %v2154, 2147483648
  %v2169 = vmul.f32 %v2168, 1.442695
  %v2170 = vpow.pop %v2169
  %v2171 = vadd.f32 %v2170, 1.0
  %v2172 = vrcp.pop %v2171
  %v2173 = vmul.f32 1.0, %v2172
  %v2174 = vmul.f32 %v2166, %v1935
  %v2175 = vmul.f32 %v2160, %v2167
  %v2176 = vadd.f32 %v2174, %v2175
  %v2177 = vtanh.pop %v2176
  %v2178 = vmul.f32 %v2173, %v2177
  %s2179 = scalar_lea.vmem %s2, 64
  %2180 = vst [vmem:[%s2179] sm:$0xff] %v2178
  %2181 = vst [vmem:[%s3] sm:$0xff] %v2178
  %2182 = vst [vmem:[%s4] sm:$0xff] %v2176
  // Predicated region
  $region10: #{_forward_impl.1} parent=0 // pred_check
    _
  $region11: #{_forward_impl.1} parent=0 // pred_check_branch
    %2184 = sbr.rel (0) target = $region13
  $region12: #{_forward_impl.1} parent=0 // pred_region
    _
  $region13: #{_forward_impl.1} parent=0 // pred_fallthru
    _
  // Predicated region
  $region14: #{_forward_impl.1} parent=0 // pred_check
    _
  $region15: #{_forward_impl.1} parent=0 // pred_check_branch
    %2186 = sbr.rel (0) target = $region17
  $region16: #{_forward_impl.1} parent=0 // pred_region
    _
  $region17: #{_forward_impl.1} parent=0 // pred_fallthru
    _
  // Predicated region
  $region18: #{_forward_impl.1} parent=0 // pred_check
    _
  $region19: #{_forward_impl.1} parent=0 // pred_check_branch
    %2188 = sbr.rel (0) target = $region21
  $region20: #{_forward_impl.1} parent=0 // pred_region
    _
  $region21: #{_forward_impl.1} parent=0 // pred_fallthru
    _
  // Predicated region
  $region22: #{_forward_impl.1} parent=0 // pred_check
    _
  $region23: #{_forward_impl.1} parent=0 // pred_check_branch
    %2190 = sbr.rel (0) target = $region25
  $region24: #{_forward_impl.1} parent=0 // pred_region
    _
  $region25: #{_forward_impl.1} parent=0 // pred_fallthru
    _
  // Predicated region
  $region26: #{_forward_impl.1} parent=0 // pred_check
    _
  $region27: #{_forward_impl.1} parent=0 // pred_check_branch
    %2192 = sbr.rel (0) target = $region29
  $region28: #{_forward_impl.1} parent=0 // pred_region
    _
  $region29: #{_forward_impl.1} parent=0 // pred_fallthru
    _
  // Predicated region
  $region30: #{_forward_impl.1} parent=0 // pred_check
    _
  $region31: #{_forward_impl.1} parent=0 // pred_check_branch
    %2194 = sbr.rel (0) target = $region33
  $region32: #{_forward_impl.1} parent=0 // pred_region
    _
  $region33: #{_forward_impl.1} parent=0 // pred_fallthru
    _

</llo_original>
